<compile_context>
chip_gen: v5e
topology: v5e:2x2
jax: 0.10.0
libtpu: 0.0.40
codegen_flags: <defaults>
</compile_context>

<pallas_src>
import functools

import jax
import jax.numpy as jnp
import numpy as np
from jax.experimental import pallas as pl
from jax.experimental.pallas import tpu as pltpu

EPS = 1e-5                      # ContBatchNorm2d default eps
VMEM_LIMIT = 32 * 1024 * 1024   # safe on v5e/v6e (128 MiB) and v7x (64 MiB)


def _elu(y):
    # nn.ELU(alpha=1.0): y if y > 0 else exp(y) - 1
    return jnp.where(y > 0, y, jnp.exp(jnp.minimum(y, 0.0)) - 1.0)


def _pick_tm(m, target):
    """Largest multiple-of-16 divisor of m that is <= target (else full m)."""
    target = max(16, min(target, m))
    for tm in range(target - target % 16, 0, -16):
        if m % tm == 0:
            return tm
    return m


# ----------------------------------------------------------------------------
# Kernel 1: conv-as-single-GEMM + batch-norm statistics accumulation
# ----------------------------------------------------------------------------
def _conv_stats_kernel(p_ref, w_ref, y_ref, sum_ref, ssq_ref):
    i = pl.program_id(0)
    # One MXU GEMM per tile: K = taps*Cin folded into the contraction dim,
    # bf16 inputs, f32 accumulation.  (Conv bias omitted: cancelled by BN.)
    y = jnp.dot(p_ref[...], w_ref[...], preferred_element_type=jnp.float32)
    y_ref[...] = y

    # Per-channel sum / sum-of-squares accumulated across the M grid axis
    # (stats outputs keep a constant block index => grid-resident accumulators).
    @pl.when(i == 0)
    def _():
        sum_ref[...] = jnp.zeros_like(sum_ref)
        ssq_ref[...] = jnp.zeros_like(ssq_ref)

    sum_ref[...] += jnp.sum(y, axis=0, keepdims=True)
    ssq_ref[...] += jnp.sum(y * y, axis=0, keepdims=True)


def conv_stats(patches, w, tm_target):
    """patches: (M, K), w: (K, Cout) -> (y (M, Cout), sum (1, Cout), sumsq (1, Cout))."""
    M, K = patches.shape
    Cout = w.shape[-1]
    tm = _pick_tm(M, tm_target)
    return pl.pallas_call(
        _conv_stats_kernel,
        out_shape=(jax.ShapeDtypeStruct((M, Cout), jnp.float32),
                   jax.ShapeDtypeStruct((1, Cout), jnp.float32),
                   jax.ShapeDtypeStruct((1, Cout), jnp.float32)),
        grid=(M // tm,),
        in_specs=[
            pl.BlockSpec((tm, K), lambda i: (i, 0)),
            pl.BlockSpec((K, Cout), lambda i: (0, 0)),
        ],
        out_specs=(
            pl.BlockSpec((tm, Cout), lambda i: (i, 0)),
            pl.BlockSpec((1, Cout), lambda i: (0, 0)),
            pl.BlockSpec((1, Cout), lambda i: (0, 0)),
        ),
        compiler_params=pltpu.CompilerParams(
            # M axis carries the stats accumulators -> reduction axis.
            dimension_semantics=("arbitrary",),
            vmem_limit_bytes=VMEM_LIMIT),
    )(patches.astype(jnp.bfloat16), w.astype(jnp.bfloat16))


# ----------------------------------------------------------------------------
# Kernel 2: fused BatchNorm(batch stats) + ELU  (optionally + residual + ELU)
# ----------------------------------------------------------------------------
def _bn_elu_kernel(y_ref, sum_ref, ssq_ref, g_ref, b_ref, o_ref, *, m):
    inv_m = 1.0 / m
    mean = sum_ref[...] * inv_m
    var = ssq_ref[...] * inv_m - mean * mean          # biased batch variance
    scale = g_ref[...] * jax.lax.rsqrt(var + EPS)
    shift = b_ref[...] - mean * scale
    o_ref[...] = _elu(y_ref[...] * scale + shift)


def _bn_elu_add_elu_kernel(y_ref, sum_ref, ssq_ref, g_ref, b_ref, d_ref, o_ref, *, m):
    inv_m = 1.0 / m
    mean = sum_ref[...] * inv_m
    var = ssq_ref[...] * inv_m - mean * mean
    scale = g_ref[...] * jax.lax.rsqrt(var + EPS)
    shift = b_ref[...] - mean * scale
    t = _elu(y_ref[...] * scale + shift)              # last LUConv activation
    o_ref[...] = _elu(t + d_ref[...])                 # relu2(out + down) fused


def _bn_apply(y, stats_sum, stats_ssq, gamma, beta, down, tm_target):
    M, C = y.shape
    tm = _pick_tm(M, tm_target)
    g2 = gamma.reshape(1, C).astype(jnp.float32)
    b2 = beta.reshape(1, C).astype(jnp.float32)

    row_spec = pl.BlockSpec((tm, C), lambda i: (i, 0))
    vec_spec = pl.BlockSpec((1, C), lambda i: (0, 0))

    in_specs = [row_spec, vec_spec, vec_spec, vec_spec, vec_spec]
    args = [y, stats_sum, stats_ssq, g2, b2]
    if down is None:
        kernel = functools.partial(_bn_elu_kernel, m=M)
    else:
        kernel = functools.partial(_bn_elu_add_elu_kernel, m=M)
        in_specs.append(row_spec)
        args.append(down)

    return pl.pallas_call(
        kernel,
        out_shape=jax.ShapeDtypeStruct((M, C), jnp.float32),
        grid=(M // tm,),
        in_specs=in_specs,
        out_specs=row_spec,
        compiler_params=pltpu.CompilerParams(
            dimension_semantics=("parallel",),        # megacore on v7x
            vmem_limit_bytes=VMEM_LIMIT),
    )(*args)


def bn_elu(y, s, q, gamma, beta, tm_target):
    return _bn_apply(y, s, q, gamma, beta, None, tm_target)


def bn_elu_add_elu(y, s, q, gamma, beta, down, tm_target):
    return _bn_apply(y, s, q, gamma, beta, down, tm_target)


# Only used for the degenerate nConvs == 0 case.
def _add_elu_kernel(a_ref, b_ref, o_ref):
    o_ref[...] = _elu(a_ref[...] + b_ref[...])


def add_elu(a, b, tm_target):
    M, C = a.shape
    tm = _pick_tm(M, tm_target)
    spec = pl.BlockSpec((tm, C), lambda i: (i, 0))
    return pl.pallas_call(
        _add_elu_kernel,
        out_shape=jax.ShapeDtypeStruct((M, C), jnp.float32),
        grid=(M // tm,),
        in_specs=[spec, spec],
        out_specs=spec,
        compiler_params=pltpu.CompilerParams(
            dimension_semantics=("parallel",),
            vmem_limit_bytes=VMEM_LIMIT),
    )(a, b)


# ----------------------------------------------------------------------------
# Glue (layout only): im2col with the tap axis folded into the column axis
# ----------------------------------------------------------------------------
def _im2col(x_nhwc, k, stride, pad):
    """NHWC -> (M, k*k*C) patches; columns ordered (di, dj) major, channel fastest."""
    # TODO(synk): build the k=5 halo'd patch tile inside the conv kernel (or via
    # manual halo DMA with memory_space=pl.ANY) instead of materialising the
    # k*k*C-wide patches in HBM -- this glue still pushes ~k^2x the activation
    # bytes through HBM per conv layer.
    N, H, W, C = x_nhwc.shape
    xp = jnp.pad(x_nhwc, ((0, 0), (pad, pad), (pad, pad), (0, 0)))
    Ho = (H + 2 * pad - k) // stride + 1
    Wo = (W + 2 * pad - k) // stride + 1
    taps = []
    for di in range(k):
        for dj in range(k):
            sl = xp[:, di:di + stride * (Ho - 1) + 1:stride,
                    dj:dj + stride * (Wo - 1) + 1:stride, :]
            taps.append(sl.reshape(N * Ho * Wo, C))
    return jnp.concatenate(taps, axis=1), (N, Ho, Wo, C)


def _reorder_weight(w):
    # (Co, Ci, kh, kw) -> (kh*kw*Ci, Co), matching _im2col column order.
    Co, Ci, kh, kw = w.shape
    return jnp.transpose(w, (2, 3, 1, 0)).reshape(kh * kw * Ci, Co)


def down_transition_forward(x_nchw, params, n_convs, tm_target=512):
    """Pallas DownTransition.forward (elu=True, dropout=False => do1 passthrough)."""
    x = jnp.transpose(x_nchw, (0, 2, 3, 1)).astype(jnp.float32)  # NCHW -> NHWC
    N = x.shape[0]
    out_chans = params["down_w"].shape[0]
    # TODO(synk): with C=8 the (M, C) layout leaves >90% of lanes / MXU columns
    # idle (masked stores); real VNet stages use C >= 32..256 where this layout
    # is lane-dense.  For tiny C, pack spatial positions into the lane axis.

    # down = relu1(bn1(down_conv(x)))
    patches, (_, Ho, Wo, _) = _im2col(x, k=2, stride=2, pad=0)
    y, s, q = conv_stats(patches, _reorder_weight(params["down_w"]), tm_target)
    down = bn_elu(y, s, q, params["bn1_g"], params["bn1_b"], tm_target)

    # out = ops(do1(down)); the last layer fuses relu2(out + down).
    out = down
    for i in range(n_convs):
        out_nhwc = out.reshape(N, Ho, Wo, out_chans)
        patches, _ = _im2col(out_nhwc, k=5, stride=1, pad=2)
        y, s, q = conv_stats(patches, _reorder_weight(params[f"conv{i}_w"]), tm_target)
        if i == n_convs - 1:
            out = bn_elu_add_elu(y, s, q, params[f"bn{i}_g"], params[f"bn{i}_b"],
                                 down, tm_target)
        else:
            out = bn_elu(y, s, q, params[f"bn{i}_g"], params[f"bn{i}_b"], tm_target)
    if n_convs == 0:
        out = add_elu(out, down, tm_target)   # relu2(down + down)

    out = out.reshape(N, Ho, Wo, out_chans)
    return jnp.transpose(out, (0, 3, 1, 2))   # NHWC -> NCHW


# ----------------------------------------------------------------------------
# Pure-JAX reference (mirrors the PyTorch forward exactly, incl. conv biases)
# ----------------------------------------------------------------------------
def _ref_conv(x, w, b, stride, pad):
    out = jax.lax.conv_general_dilated(
        x, w, window_strides=(stride, stride), padding=[(pad, pad), (pad, pad)],
        dimension_numbers=("NCHW", "OIHW", "NCHW"))
    return out + b[None, :, None, None]


def _ref_bn(x, g, b):
    mean = jnp.mean(x, axis=(0, 2, 3), keepdims=True)
    var = jnp.mean((x - mean) ** 2, axis=(0, 2, 3), keepdims=True)
    return (x - mean) * jax.lax.rsqrt(var + EPS) * g[None, :, None, None] \
        + b[None, :, None, None]


def ref_forward(x, params, n_convs):
    down = _elu(_ref_bn(_ref_conv(x, params["down_w"], params["down_b"], 2, 0),
                        params["bn1_g"], params["bn1_b"]))
    out = down
    for i in range(n_convs):
        out = _elu(_ref_bn(_ref_conv(out, params[f"conv{i}_w"],
                                     params[f"conv{i}_b"], 1, 2),
                           params[f"bn{i}_g"], params[f"bn{i}_b"]))
    return _elu(out + down)


# ----------------------------------------------------------------------------
if __name__ == "__main__":
    # DownTransition(inChans=4, nConvs=2, elu=True, dropout=False)
    in_chans, n_convs = 4, 2
    out_chans = 2 * in_chans
    N, H, W = 2, 16, 16

    key = jax.random.PRNGKey(0)
    ks = jax.random.split(key, 4 + 4 * n_convs + 1)

    params = {
        "down_w": 0.1 * jax.random.normal(ks[0], (out_chans, in_chans, 2, 2), jnp.float32),
        "down_b": 0.1 * jax.random.normal(ks[1], (out_chans,), jnp.float32),
        "bn1_g": 1.0 + 0.1 * jax.random.normal(ks[2], (out_chans,), jnp.float32),
        "bn1_b": 0.1 * jax.random.normal(ks[3], (out_chans,), jnp.float32),
    }
    for i in range(n_convs):
        base = 4 + 4 * i
        params[f"conv{i}_w"] = 0.05 * jax.random.normal(
            ks[base], (out_chans, out_chans, 5, 5), jnp.float32)
        params[f"conv{i}_b"] = 0.1 * jax.random.normal(ks[base + 1], (out_chans,), jnp.float32)
        params[f"bn{i}_g"] = 1.0 + 0.1 * jax.random.normal(ks[base + 2], (out_chans,), jnp.float32)
        params[f"bn{i}_b"] = 0.1 * jax.random.normal(ks[base + 3], (out_chans,), jnp.float32)

    x = jax.random.normal(ks[-1], (N, in_chans, H, W), jnp.float32)  # NCHW input

    # Small tm_target so the M=128 rows split into multiple grid steps,
    # exercising the pipelined tiles and the cross-tile BN-stats accumulator.
    fwd = jax.jit(functools.partial(down_transition_forward,
                                    n_convs=n_convs, tm_target=64))
    out = jax.block_until_ready(fwd(x, params))

    ref = jax.block_until_ready(ref_forward(x, params, n_convs))
    assert out.shape == (N, out_chans, H // 2, W // 2)
    # bf16 MXU inputs (f32 accumulation) -> slightly looser tolerance vs f32 ref.
    np.testing.assert_allclose(np.asarray(out), np.asarray(ref), rtol=3e-2, atol=3e-2)

    print("KERNEL_OK")
</pallas_src>

<mosaic_0001>
module attributes {stable_mosaic.version = 11 : i64} {
  func.func @_bn_elu_kernel(%arg0: i32, %arg1: memref<64x8xf32, #tpu.memory_space<vmem>>, %arg2: memref<1x8xf32, #tpu.memory_space<vmem>>, %arg3: memref<1x8xf32, #tpu.memory_space<vmem>>, %arg4: memref<1x8xf32, #tpu.memory_space<vmem>>, %arg5: memref<1x8xf32, #tpu.memory_space<vmem>>, %arg6: memref<64x8xf32, #tpu.memory_space<vmem>>) attributes {dimension_semantics = [#tpu.dimension_semantics<parallel>], iteration_bounds = array<i64: 2>, scalar_prefetch = 0 : i64, scratch_operands = 0 : i64, tpu.core_type = #tpu.core_type<tc>, window_params = [{transform_indices = @transform_0, window_bounds = array<i64: 64, 8>}, {pipeline_mode = #tpu.pipeline_mode<synchronous>, transform_indices = @transform_1, window_bounds = array<i64: 1, 8>}, {pipeline_mode = #tpu.pipeline_mode<synchronous>, transform_indices = @transform_2, window_bounds = array<i64: 1, 8>}, {pipeline_mode = #tpu.pipeline_mode<synchronous>, transform_indices = @transform_3, window_bounds = array<i64: 1, 8>}, {pipeline_mode = #tpu.pipeline_mode<synchronous>, transform_indices = @transform_4, window_bounds = array<i64: 1, 8>}, {transform_indices = @transform_5, window_bounds = array<i64: 64, 8>}]} {
    %c0 = arith.constant 0 : index
    %c0_0 = arith.constant 0 : index
    %0 = vector.load %arg2[%c0, %c0_0] : memref<1x8xf32, #tpu.memory_space<vmem>>, vector<1x8xf32>
    %cst = arith.constant 7.812500e-03 : f32
    %1 = vector.broadcast %cst : f32 to vector<1x8xf32>
    %2 = arith.mulf %0, %1 : vector<1x8xf32>
    %c0_1 = arith.constant 0 : index
    %c0_2 = arith.constant 0 : index
    %3 = vector.load %arg3[%c0_1, %c0_2] : memref<1x8xf32, #tpu.memory_space<vmem>>, vector<1x8xf32>
    %cst_3 = arith.constant 7.812500e-03 : f32
    %4 = vector.broadcast %cst_3 : f32 to vector<1x8xf32>
    %5 = arith.mulf %3, %4 : vector<1x8xf32>
    %6 = arith.mulf %2, %2 : vector<1x8xf32>
    %7 = arith.subf %5, %6 : vector<1x8xf32>
    %c0_4 = arith.constant 0 : index
    %c0_5 = arith.constant 0 : index
    %8 = vector.load %arg4[%c0_4, %c0_5] : memref<1x8xf32, #tpu.memory_space<vmem>>, vector<1x8xf32>
    %cst_6 = arith.constant 9.99999974E-6 : f32
    %9 = vector.broadcast %cst_6 : f32 to vector<1x8xf32>
    %10 = arith.addf %7, %9 : vector<1x8xf32>
    %11 = math.rsqrt %10 : vector<1x8xf32>
    %12 = arith.mulf %8, %11 : vector<1x8xf32>
    %c0_7 = arith.constant 0 : index
    %c0_8 = arith.constant 0 : index
    %13 = vector.load %arg5[%c0_7, %c0_8] : memref<1x8xf32, #tpu.memory_space<vmem>>, vector<1x8xf32>
    %14 = arith.mulf %2, %12 : vector<1x8xf32>
    %15 = arith.subf %13, %14 : vector<1x8xf32>
    %c0_9 = arith.constant 0 : index
    %c0_10 = arith.constant 0 : index
    %16 = vector.load %arg1[%c0_9, %c0_10] : memref<64x8xf32, #tpu.memory_space<vmem>>, vector<64x8xf32>
    %17 = vector.broadcast %12 : vector<1x8xf32> to vector<64x8xf32>
    %18 = arith.mulf %16, %17 : vector<64x8xf32>
    %19 = vector.broadcast %15 : vector<1x8xf32> to vector<64x8xf32>
    %20 = arith.addf %18, %19 : vector<64x8xf32>
    %cst_11 = arith.constant 0.000000e+00 : f32
    %21 = vector.broadcast %cst_11 : f32 to vector<64x8xf32>
    %22 = arith.cmpf ogt, %20, %21 : vector<64x8xf32>
    %cst_12 = arith.constant 0.000000e+00 : f32
    %23 = vector.broadcast %cst_12 : f32 to vector<64x8xf32>
    %24 = arith.minimumf %20, %23 : vector<64x8xf32>
    %25 = math.exp %24 : vector<64x8xf32>
    %cst_13 = arith.constant 1.000000e+00 : f32
    %26 = vector.broadcast %cst_13 : f32 to vector<64x8xf32>
    %27 = arith.subf %25, %26 : vector<64x8xf32>
    %28 = arith.select %22, %20, %27 : vector<64x8xi1>, vector<64x8xf32>
    %c0_14 = arith.constant 0 : index
    %c0_15 = arith.constant 0 : index
    %29 = vector.load %arg6[%c0_14, %c0_15] : memref<64x8xf32, #tpu.memory_space<vmem>>, vector<64x8xf32>
    tpu.vector_store %arg6[%c0_14, %c0_15], %28 {strides = array<i32>} : memref<64x8xf32, #tpu.memory_space<vmem>>, vector<64x8xf32>,
    return
  }
  func.func @transform_0(%arg0: i32) -> (i32, i32) {
    %c0_i32 = arith.constant 0 : i32
    %c0_i32_0 = arith.constant 0 : i32
    return %arg0, %c0_i32 : i32, i32
  }
  func.func @transform_1(%arg0: i32) -> (i32, i32) {
    %c0_i32 = arith.constant 0 : i32
    %c0_i32_0 = arith.constant 0 : i32
    %c0_i32_1 = arith.constant 0 : i32
    return %c0_i32, %c0_i32_0 : i32, i32
  }
  func.func @transform_2(%arg0: i32) -> (i32, i32) {
    %c0_i32 = arith.constant 0 : i32
    %c0_i32_0 = arith.constant 0 : i32
    %c0_i32_1 = arith.constant 0 : i32
    return %c0_i32, %c0_i32_0 : i32, i32
  }
  func.func @transform_3(%arg0: i32) -> (i32, i32) {
    %c0_i32 = arith.constant 0 : i32
    %c0_i32_0 = arith.constant 0 : i32
    %c0_i32_1 = arith.constant 0 : i32
    return %c0_i32, %c0_i32_0 : i32, i32
  }
  func.func @transform_4(%arg0: i32) -> (i32, i32) {
    %c0_i32 = arith.constant 0 : i32
    %c0_i32_0 = arith.constant 0 : i32
    %c0_i32_1 = arith.constant 0 : i32
    return %c0_i32, %c0_i32_0 : i32, i32
  }
  func.func @transform_5(%arg0: i32) -> (i32, i32) {
    %c0_i32 = arith.constant 0 : i32
    %c0_i32_0 = arith.constant 0 : i32
    return %arg0, %c0_i32 : i32, i32
  }
}

module attributes {stable_mosaic.version = 11 : i64} {
  func.func @_conv_stats_kernel(%arg0: i32, %arg1: memref<64x16xbf16, #tpu.memory_space<vmem>>, %arg2: memref<16x8xbf16, #tpu.memory_space<vmem>>, %arg3: memref<64x8xf32, #tpu.memory_space<vmem>>, %arg4: memref<1x8xf32, #tpu.memory_space<vmem>>, %arg5: memref<1x8xf32, #tpu.memory_space<vmem>>) attributes {dimension_semantics = [#tpu.dimension_semantics<arbitrary>], iteration_bounds = array<i64: 2>, scalar_prefetch = 0 : i64, scratch_operands = 0 : i64, tpu.core_type = #tpu.core_type<tc>, window_params = [{transform_indices = @transform_0, window_bounds = array<i64: 64, 16>}, {pipeline_mode = #tpu.pipeline_mode<synchronous>, transform_indices = @transform_1, window_bounds = array<i64: 16, 8>}, {transform_indices = @transform_2, window_bounds = array<i64: 64, 8>}, {pipeline_mode = #tpu.pipeline_mode<synchronous>, transform_indices = @transform_3, window_bounds = array<i64: 1, 8>}, {pipeline_mode = #tpu.pipeline_mode<synchronous>, transform_indices = @transform_4, window_bounds = array<i64: 1, 8>}]} {
    %c0 = arith.constant 0 : index
    %c0_0 = arith.constant 0 : index
    %0 = vector.load %arg1[%c0, %c0_0] : memref<64x16xbf16, #tpu.memory_space<vmem>>, vector<64x16xbf16>
    %c0_1 = arith.constant 0 : index
    %c0_2 = arith.constant 0 : index
    %1 = vector.load %arg2[%c0_1, %c0_2] : memref<16x8xbf16, #tpu.memory_space<vmem>>, vector<16x8xbf16>
    %cst = arith.constant dense<0.000000e+00> : vector<64x8xf32>
    %2 = tpu.matmul %0, %1, %cst {dimension_numbers = #tpu.dot_dimension_numbers<[1], [0], [0], [1], [0, 0, 1, 1], [], []>} : vector<64x16xbf16>, vector<16x8xbf16>, vector<64x8xf32> -> vector<64x8xf32>
    %c0_3 = arith.constant 0 : index
    %c0_4 = arith.constant 0 : index
    %3 = vector.load %arg3[%c0_3, %c0_4] : memref<64x8xf32, #tpu.memory_space<vmem>>, vector<64x8xf32>
    tpu.vector_store %arg3[%c0_3, %c0_4], %2 {strides = array<i32>} : memref<64x8xf32, #tpu.memory_space<vmem>>, vector<64x8xf32>,
    %c0_i32 = arith.constant 0 : i32
    %4 = arith.cmpi eq, %arg0, %c0_i32 : i32
    %5 = arith.extui %4 : i1 to i32
    %c0_i32_5 = arith.constant 0 : i32
    %6 = arith.cmpi ne, %5, %c0_i32_5 : i32
    scf.if %6 {
      %cst_16 = arith.constant 0.000000e+00 : f32
      %18 = vector.broadcast %cst_16 : f32 to vector<1x8xf32>
      %c0_17 = arith.constant 0 : index
      %c0_18 = arith.constant 0 : index
      %19 = vector.load %arg4[%c0_17, %c0_18] : memref<1x8xf32, #tpu.memory_space<vmem>>, vector<1x8xf32>
      tpu.vector_store %arg4[%c0_17, %c0_18], %18 {strides = array<i32>} : memref<1x8xf32, #tpu.memory_space<vmem>>, vector<1x8xf32>,
      %cst_19 = arith.constant 0.000000e+00 : f32
      %20 = vector.broadcast %cst_19 : f32 to vector<1x8xf32>
      %c0_20 = arith.constant 0 : index
      %c0_21 = arith.constant 0 : index
      %21 = vector.load %arg5[%c0_20, %c0_21] : memref<1x8xf32, #tpu.memory_space<vmem>>, vector<1x8xf32>
      tpu.vector_store %arg5[%c0_20, %c0_21], %20 {strides = array<i32>} : memref<1x8xf32, #tpu.memory_space<vmem>>, vector<1x8xf32>,
    } else {
    }
    %c0_6 = arith.constant 0 : index
    %c0_7 = arith.constant 0 : index
    %7 = vector.load %arg4[%c0_6, %c0_7] : memref<1x8xf32, #tpu.memory_space<vmem>>, vector<1x8xf32>
    %cst_8 = arith.constant dense<0.000000e+00> : vector<8xf32>
    %8 = vector.multi_reduction <add>, %2, %cst_8 [0] : vector<64x8xf32> to vector<8xf32>
    %9 = vector.shape_cast %8 : vector<8xf32> to vector<1x8xf32>
    %10 = arith.addf %7, %9 : vector<1x8xf32>
    %c0_9 = arith.constant 0 : index
    %c0_10 = arith.constant 0 : index
    %11 = vector.load %arg4[%c0_9, %c0_10] : memref<1x8xf32, #tpu.memory_space<vmem>>, vector<1x8xf32>
    tpu.vector_store %arg4[%c0_9, %c0_10], %10 {strides = array<i32>} : memref<1x8xf32, #tpu.memory_space<vmem>>, vector<1x8xf32>,
    %c0_11 = arith.constant 0 : index
    %c0_12 = arith.constant 0 : index
    %12 = vector.load %arg5[%c0_11, %c0_12] : memref<1x8xf32, #tpu.memory_space<vmem>>, vector<1x8xf32>
    %13 = arith.mulf %2, %2 : vector<64x8xf32>
    %cst_13 = arith.constant dense<0.000000e+00> : vector<8xf32>
    %14 = vector.multi_reduction <add>, %13, %cst_13 [0] : vector<64x8xf32> to vector<8xf32>
    %15 = vector.shape_cast %14 : vector<8xf32> to vector<1x8xf32>
    %16 = arith.addf %12, %15 : vector<1x8xf32>
    %c0_14 = arith.constant 0 : index
    %c0_15 = arith.constant 0 : index
    %17 = vector.load %arg5[%c0_14, %c0_15] : memref<1x8xf32, #tpu.memory_space<vmem>>, vector<1x8xf32>
    tpu.vector_store %arg5[%c0_14, %c0_15], %16 {strides = array<i32>} : memref<1x8xf32, #tpu.memory_space<vmem>>, vector<1x8xf32>,
    return
  }
  func.func @transform_0(%arg0: i32) -> (i32, i32) {
    %c0_i32 = arith.constant 0 : i32
    %c0_i32_0 = arith.constant 0 : i32
    return %arg0, %c0_i32 : i32, i32
  }
  func.func @transform_1(%arg0: i32) -> (i32, i32) {
    %c0_i32 = arith.constant 0 : i32
    %c0_i32_0 = arith.constant 0 : i32
    %c0_i32_1 = arith.constant 0 : i32
    return %c0_i32, %c0_i32_0 : i32, i32
  }
  func.func @transform_2(%arg0: i32) -> (i32, i32) {
    %c0_i32 = arith.constant 0 : i32
    %c0_i32_0 = arith.constant 0 : i32
    return %arg0, %c0_i32 : i32, i32
  }
  func.func @transform_3(%arg0: i32) -> (i32, i32) {
    %c0_i32 = arith.constant 0 : i32
    %c0_i32_0 = arith.constant 0 : i32
    %c0_i32_1 = arith.constant 0 : i32
    return %c0_i32, %c0_i32_0 : i32, i32
  }
  func.func @transform_4(%arg0: i32) -> (i32, i32) {
    %c0_i32 = arith.constant 0 : i32
    %c0_i32_0 = arith.constant 0 : i32
    %c0_i32_1 = arith.constant 0 : i32
    return %c0_i32, %c0_i32_0 : i32, i32
  }
}

module attributes {stable_mosaic.version = 11 : i64} {
  func.func @_conv_stats_kernel(%arg0: i32, %arg1: memref<64x200xbf16, #tpu.memory_space<vmem>>, %arg2: memref<200x8xbf16, #tpu.memory_space<vmem>>, %arg3: memref<64x8xf32, #tpu.memory_space<vmem>>, %arg4: memref<1x8xf32, #tpu.memory_space<vmem>>, %arg5: memref<1x8xf32, #tpu.memory_space<vmem>>) attributes {dimension_semantics = [#tpu.dimension_semantics<arbitrary>], iteration_bounds = array<i64: 2>, scalar_prefetch = 0 : i64, scratch_operands = 0 : i64, tpu.core_type = #tpu.core_type<tc>, window_params = [{transform_indices = @transform_0, window_bounds = array<i64: 64, 200>}, {pipeline_mode = #tpu.pipeline_mode<synchronous>, transform_indices = @transform_1, window_bounds = array<i64: 200, 8>}, {transform_indices = @transform_2, window_bounds = array<i64: 64, 8>}, {pipeline_mode = #tpu.pipeline_mode<synchronous>, transform_indices = @transform_3, window_bounds = array<i64: 1, 8>}, {pipeline_mode = #tpu.pipeline_mode<synchronous>, transform_indices = @transform_4, window_bounds = array<i64: 1, 8>}]} {
    %c0 = arith.constant 0 : index
    %c0_0 = arith.constant 0 : index
    %0 = vector.load %arg1[%c0, %c0_0] : memref<64x200xbf16, #tpu.memory_space<vmem>>, vector<64x200xbf16>
    %c0_1 = arith.constant 0 : index
    %c0_2 = arith.constant 0 : index
    %1 = vector.load %arg2[%c0_1, %c0_2] : memref<200x8xbf16, #tpu.memory_space<vmem>>, vector<200x8xbf16>
    %cst = arith.constant dense<0.000000e+00> : vector<64x8xf32>
    %2 = tpu.matmul %0, %1, %cst {dimension_numbers = #tpu.dot_dimension_numbers<[1], [0], [0], [1], [0, 0, 1, 1], [], []>} : vector<64x200xbf16>, vector<200x8xbf16>, vector<64x8xf32> -> vector<64x8xf32>
    %c0_3 = arith.constant 0 : index
    %c0_4 = arith.constant 0 : index
    %3 = vector.load %arg3[%c0_3, %c0_4] : memref<64x8xf32, #tpu.memory_space<vmem>>, vector<64x8xf32>
    tpu.vector_store %arg3[%c0_3, %c0_4], %2 {strides = array<i32>} : memref<64x8xf32, #tpu.memory_space<vmem>>, vector<64x8xf32>,
    %c0_i32 = arith.constant 0 : i32
    %4 = arith.cmpi eq, %arg0, %c0_i32 : i32
    %5 = arith.extui %4 : i1 to i32
    %c0_i32_5 = arith.constant 0 : i32
    %6 = arith.cmpi ne, %5, %c0_i32_5 : i32
    scf.if %6 {
      %cst_16 = arith.constant 0.000000e+00 : f32
      %18 = vector.broadcast %cst_16 : f32 to vector<1x8xf32>
      %c0_17 = arith.constant 0 : index
      %c0_18 = arith.constant 0 : index
      %19 = vector.load %arg4[%c0_17, %c0_18] : memref<1x8xf32, #tpu.memory_space<vmem>>, vector<1x8xf32>
      tpu.vector_store %arg4[%c0_17, %c0_18], %18 {strides = array<i32>} : memref<1x8xf32, #tpu.memory_space<vmem>>, vector<1x8xf32>,
      %cst_19 = arith.constant 0.000000e+00 : f32
      %20 = vector.broadcast %cst_19 : f32 to vector<1x8xf32>
      %c0_20 = arith.constant 0 : index
      %c0_21 = arith.constant 0 : index
      %21 = vector.load %arg5[%c0_20, %c0_21] : memref<1x8xf32, #tpu.memory_space<vmem>>, vector<1x8xf32>
      tpu.vector_store %arg5[%c0_20, %c0_21], %20 {strides = array<i32>} : memref<1x8xf32, #tpu.memory_space<vmem>>, vector<1x8xf32>,
    } else {
    }
    %c0_6 = arith.constant 0 : index
    %c0_7 = arith.constant 0 : index
    %7 = vector.load %arg4[%c0_6, %c0_7] : memref<1x8xf32, #tpu.memory_space<vmem>>, vector<1x8xf32>
    %cst_8 = arith.constant dense<0.000000e+00> : vector<8xf32>
    %8 = vector.multi_reduction <add>, %2, %cst_8 [0] : vector<64x8xf32> to vector<8xf32>
    %9 = vector.shape_cast %8 : vector<8xf32> to vector<1x8xf32>
    %10 = arith.addf %7, %9 : vector<1x8xf32>
    %c0_9 = arith.constant 0 : index
    %c0_10 = arith.constant 0 : index
    %11 = vector.load %arg4[%c0_9, %c0_10] : memref<1x8xf32, #tpu.memory_space<vmem>>, vector<1x8xf32>
    tpu.vector_store %arg4[%c0_9, %c0_10], %10 {strides = array<i32>} : memref<1x8xf32, #tpu.memory_space<vmem>>, vector<1x8xf32>,
    %c0_11 = arith.constant 0 : index
    %c0_12 = arith.constant 0 : index
    %12 = vector.load %arg5[%c0_11, %c0_12] : memref<1x8xf32, #tpu.memory_space<vmem>>, vector<1x8xf32>
    %13 = arith.mulf %2, %2 : vector<64x8xf32>
    %cst_13 = arith.constant dense<0.000000e+00> : vector<8xf32>
    %14 = vector.multi_reduction <add>, %13, %cst_13 [0] : vector<64x8xf32> to vector<8xf32>
    %15 = vector.shape_cast %14 : vector<8xf32> to vector<1x8xf32>
    %16 = arith.addf %12, %15 : vector<1x8xf32>
    %c0_14 = arith.constant 0 : index
    %c0_15 = arith.constant 0 : index
    %17 = vector.load %arg5[%c0_14, %c0_15] : memref<1x8xf32, #tpu.memory_space<vmem>>, vector<1x8xf32>
    tpu.vector_store %arg5[%c0_14, %c0_15], %16 {strides = array<i32>} : memref<1x8xf32, #tpu.memory_space<vmem>>, vector<1x8xf32>,
    return
  }
  func.func @transform_0(%arg0: i32) -> (i32, i32) {
    %c0_i32 = arith.constant 0 : i32
    %c0_i32_0 = arith.constant 0 : i32
    return %arg0, %c0_i32 : i32, i32
  }
  func.func @transform_1(%arg0: i32) -> (i32, i32) {
    %c0_i32 = arith.constant 0 : i32
    %c0_i32_0 = arith.constant 0 : i32
    %c0_i32_1 = arith.constant 0 : i32
    return %c0_i32, %c0_i32_0 : i32, i32
  }
  func.func @transform_2(%arg0: i32) -> (i32, i32) {
    %c0_i32 = arith.constant 0 : i32
    %c0_i32_0 = arith.constant 0 : i32
    return %arg0, %c0_i32 : i32, i32
  }
  func.func @transform_3(%arg0: i32) -> (i32, i32) {
    %c0_i32 = arith.constant 0 : i32
    %c0_i32_0 = arith.constant 0 : i32
    %c0_i32_1 = arith.constant 0 : i32
    return %c0_i32, %c0_i32_0 : i32, i32
  }
  func.func @transform_4(%arg0: i32) -> (i32, i32) {
    %c0_i32 = arith.constant 0 : i32
    %c0_i32_0 = arith.constant 0 : i32
    %c0_i32_1 = arith.constant 0 : i32
    return %c0_i32, %c0_i32_0 : i32, i32
  }
}

module attributes {stable_mosaic.version = 11 : i64} {
  func.func @_bn_elu_add_elu_kernel(%arg0: i32, %arg1: memref<64x8xf32, #tpu.memory_space<vmem>>, %arg2: memref<1x8xf32, #tpu.memory_space<vmem>>, %arg3: memref<1x8xf32, #tpu.memory_space<vmem>>, %arg4: memref<1x8xf32, #tpu.memory_space<vmem>>, %arg5: memref<1x8xf32, #tpu.memory_space<vmem>>, %arg6: memref<64x8xf32, #tpu.memory_space<vmem>>, %arg7: memref<64x8xf32, #tpu.memory_space<vmem>>) attributes {dimension_semantics = [#tpu.dimension_semantics<parallel>], iteration_bounds = array<i64: 2>, scalar_prefetch = 0 : i64, scratch_operands = 0 : i64, tpu.core_type = #tpu.core_type<tc>, window_params = [{transform_indices = @transform_0, window_bounds = array<i64: 64, 8>}, {pipeline_mode = #tpu.pipeline_mode<synchronous>, transform_indices = @transform_1, window_bounds = array<i64: 1, 8>}, {pipeline_mode = #tpu.pipeline_mode<synchronous>, transform_indices = @transform_2, window_bounds = array<i64: 1, 8>}, {pipeline_mode = #tpu.pipeline_mode<synchronous>, transform_indices = @transform_3, window_bounds = array<i64: 1, 8>}, {pipeline_mode = #tpu.pipeline_mode<synchronous>, transform_indices = @transform_4, window_bounds = array<i64: 1, 8>}, {transform_indices = @transform_5, window_bounds = array<i64: 64, 8>}, {transform_indices = @transform_6, window_bounds = array<i64: 64, 8>}]} {
    %c0 = arith.constant 0 : index
    %c0_0 = arith.constant 0 : index
    %0 = vector.load %arg2[%c0, %c0_0] : memref<1x8xf32, #tpu.memory_space<vmem>>, vector<1x8xf32>
    %cst = arith.constant 7.812500e-03 : f32
    %1 = vector.broadcast %cst : f32 to vector<1x8xf32>
    %2 = arith.mulf %0, %1 : vector<1x8xf32>
    %c0_1 = arith.constant 0 : index
    %c0_2 = arith.constant 0 : index
    %3 = vector.load %arg3[%c0_1, %c0_2] : memref<1x8xf32, #tpu.memory_space<vmem>>, vector<1x8xf32>
    %cst_3 = arith.constant 7.812500e-03 : f32
    %4 = vector.broadcast %cst_3 : f32 to vector<1x8xf32>
    %5 = arith.mulf %3, %4 : vector<1x8xf32>
    %6 = arith.mulf %2, %2 : vector<1x8xf32>
    %7 = arith.subf %5, %6 : vector<1x8xf32>
    %c0_4 = arith.constant 0 : index
    %c0_5 = arith.constant 0 : index
    %8 = vector.load %arg4[%c0_4, %c0_5] : memref<1x8xf32, #tpu.memory_space<vmem>>, vector<1x8xf32>
    %cst_6 = arith.constant 9.99999974E-6 : f32
    %9 = vector.broadcast %cst_6 : f32 to vector<1x8xf32>
    %10 = arith.addf %7, %9 : vector<1x8xf32>
    %11 = math.rsqrt %10 : vector<1x8xf32>
    %12 = arith.mulf %8, %11 : vector<1x8xf32>
    %c0_7 = arith.constant 0 : index
    %c0_8 = arith.constant 0 : index
    %13 = vector.load %arg5[%c0_7, %c0_8] : memref<1x8xf32, #tpu.memory_space<vmem>>, vector<1x8xf32>
    %14 = arith.mulf %2, %12 : vector<1x8xf32>
    %15 = arith.subf %13, %14 : vector<1x8xf32>
    %c0_9 = arith.constant 0 : index
    %c0_10 = arith.constant 0 : index
    %16 = vector.load %arg1[%c0_9, %c0_10] : memref<64x8xf32, #tpu.memory_space<vmem>>, vector<64x8xf32>
    %17 = vector.broadcast %12 : vector<1x8xf32> to vector<64x8xf32>
    %18 = arith.mulf %16, %17 : vector<64x8xf32>
    %19 = vector.broadcast %15 : vector<1x8xf32> to vector<64x8xf32>
    %20 = arith.addf %18, %19 : vector<64x8xf32>
    %cst_11 = arith.constant 0.000000e+00 : f32
    %21 = vector.broadcast %cst_11 : f32 to vector<64x8xf32>
    %22 = arith.cmpf ogt, %20, %21 : vector<64x8xf32>
    %cst_12 = arith.constant 0.000000e+00 : f32
    %23 = vector.broadcast %cst_12 : f32 to vector<64x8xf32>
    %24 = arith.minimumf %20, %23 : vector<64x8xf32>
    %25 = math.exp %24 : vector<64x8xf32>
    %cst_13 = arith.constant 1.000000e+00 : f32
    %26 = vector.broadcast %cst_13 : f32 to vector<64x8xf32>
    %27 = arith.subf %25, %26 : vector<64x8xf32>
    %28 = arith.select %22, %20, %27 : vector<64x8xi1>, vector<64x8xf32>
    %c0_14 = arith.constant 0 : index
    %c0_15 = arith.constant 0 : index
    %29 = vector.load %arg6[%c0_14, %c0_15] : memref<64x8xf32, #tpu.memory_space<vmem>>, vector<64x8xf32>
    %30 = arith.addf %28, %29 : vector<64x8xf32>
    %cst_16 = arith.constant 0.000000e+00 : f32
    %31 = vector.broadcast %cst_16 : f32 to vector<64x8xf32>
    %32 = arith.cmpf ogt, %30, %31 : vector<64x8xf32>
    %cst_17 = arith.constant 0.000000e+00 : f32
    %33 = vector.broadcast %cst_17 : f32 to vector<64x8xf32>
    %34 = arith.minimumf %30, %33 : vector<64x8xf32>
    %35 = math.exp %34 : vector<64x8xf32>
    %cst_18 = arith.constant 1.000000e+00 : f32
    %36 = vector.broadcast %cst_18 : f32 to vector<64x8xf32>
    %37 = arith.subf %35, %36 : vector<64x8xf32>
    %38 = arith.select %32, %30, %37 : vector<64x8xi1>, vector<64x8xf32>
    %c0_19 = arith.constant 0 : index
    %c0_20 = arith.constant 0 : index
    %39 = vector.load %arg7[%c0_19, %c0_20] : memref<64x8xf32, #tpu.memory_space<vmem>>, vector<64x8xf32>
    tpu.vector_store %arg7[%c0_19, %c0_20], %38 {strides = array<i32>} : memref<64x8xf32, #tpu.memory_space<vmem>>, vector<64x8xf32>,
    return
  }
  func.func @transform_0(%arg0: i32) -> (i32, i32) {
    %c0_i32 = arith.constant 0 : i32
    %c0_i32_0 = arith.constant 0 : i32
    return %arg0, %c0_i32 : i32, i32
  }
  func.func @transform_1(%arg0: i32) -> (i32, i32) {
    %c0_i32 = arith.constant 0 : i32
    %c0_i32_0 = arith.constant 0 : i32
    %c0_i32_1 = arith.constant 0 : i32
    return %c0_i32, %c0_i32_0 : i32, i32
  }
  func.func @transform_2(%arg0: i32) -> (i32, i32) {
    %c0_i32 = arith.constant 0 : i32
    %c0_i32_0 = arith.constant 0 : i32
    %c0_i32_1 = arith.constant 0 : i32
    return %c0_i32, %c0_i32_0 : i32, i32
  }
  func.func @transform_3(%arg0: i32) -> (i32, i32) {
    %c0_i32 = arith.constant 0 : i32
    %c0_i32_0 = arith.constant 0 : i32
    %c0_i32_1 = arith.constant 0 : i32
    return %c0_i32, %c0_i32_0 : i32, i32
  }
  func.func @transform_4(%arg0: i32) -> (i32, i32) {
    %c0_i32 = arith.constant 0 : i32
    %c0_i32_0 = arith.constant 0 : i32
    %c0_i32_1 = arith.constant 0 : i32
    return %c0_i32, %c0_i32_0 : i32, i32
  }
  func.func @transform_5(%arg0: i32) -> (i32, i32) {
    %c0_i32 = arith.constant 0 : i32
    %c0_i32_0 = arith.constant 0 : i32
    return %arg0, %c0_i32 : i32, i32
  }
  func.func @transform_6(%arg0: i32) -> (i32, i32) {
    %c0_i32 = arith.constant 0 : i32
    %c0_i32_0 = arith.constant 0 : i32
    return %arg0, %c0_i32 : i32, i32
  }
}

</mosaic_0001>

<llo_original>
// kernel: down_transition_forward.7
$region0: #{down_transition_forward.7}
  #allocation0 [shape = 'u32[]', space=smem, size = 0x4, offset = 0x4, fixed_abs, tag = 'smem constant byte address 0x4 - core index']
  #allocation1 [shape = 'u32[72,128]{1,0:T(1,128)}', space=vmem, size = 0x9000, scoped, tag = 'internal scratch']
  %s0 = inlined_call_operand.vmem [shape: f32[128,8], index: 0, kind: input, shape index: {}]
  %s1 = inlined_call_operand.vmem [shape: f32[1,8], index: 1, kind: input, shape index: {}]
  %s2 = inlined_call_operand.vmem [shape: f32[1,8], index: 2, kind: input, shape index: {}]
  %s3 = inlined_call_operand.vmem [shape: f32[1,8], index: 3, kind: input, shape index: {}]
  %s4 = inlined_call_operand.vmem [shape: f32[1,8], index: 4, kind: input, shape index: {}]
  %s5 = inlined_call_operand.vmem [shape: f32[128,8], index: 5, kind: output, shape index: {}]
  %s6 = sld [smem:[#allocation0]]
  $region53: #{down_transition_forward.7} parent=0
    _
  %s8 = ssub.s32 1, %s6
  %s9 = scalar_select 0, %s8, %s6
  loop: start=0, step=1, limit=4
  $region2: #{down_transition_forward.7} parent=0 // loop_pre_header
    _
  $region3: #{down_transition_forward.7} parent=0 // loop_header
    %s11 = sphi 0, %s15
    %p12 = scmp.ge.s32.totalorder %s11, 4
    %s21 = sphi 0, %s23
    %s24 = sphi 0, %s21
    %s25 = sphi 0, %s24
    %s41 = sphi 0, %s25
    %s45 = sphi 0, %s45
    %s47 = sphi 0, %s45
    %s48 = sphi 0, %s47
    %s62 = sphi 0, %s48
    %s66 = sphi 0, %s66
    %s68 = sphi 0, %s66
    %s69 = sphi 0, %s68
    %s83 = sphi 0, %s69
    %s87 = sphi 0, %s87
    %s89 = sphi 0, %s87
    %s90 = sphi 0, %s89
    %s104 = sphi 0, %s90
    %s108 = sphi 0, %s108
    %s110 = sphi 0, %s108
    %s111 = sphi 0, %s110
    %s125 = sphi 0, %s111
    %s131 = sphi 0, %s133
    %s134 = sphi 0, %s131
    %s135 = sphi 0, %s134
    %s151 = sphi 0, %s135
  $region4: #{down_transition_forward.7} parent=0 // loop_header_branch
    %14 = sbr.rel (%p12) target = $region8
  $region5: #{down_transition_forward.7} parent=0 // loop_body
    %s16 = ssub.s32 %s11, 1
    %s17 = ssub.s32 %s11, 2
    %s18 = sadd.s32 %s11, 1
    %s19 = ssub.s32 %s11, %s18
    %p20 = scmp.eq.s32.totalorder %s19, 0
    %s22 = sadd.s32 %s21, 1
    %s23 = scalar_select %p20, %s21, %s22
    %p26 = pneg %p20
    %p27 = scmp.eq.s32.totalorder %s11, 1
    %p28 = por %p26, %p27
    %p29 = scmp.ne.s32.totalorder %s21, %s24
    %p30 = scmp.eq.s32.totalorder %s11, 0
    %p31 = por %p29, %p30
    %p32 = scmp.ne.s32.totalorder %s21, %s24
    %p33 = scmp.eq.s32.totalorder %s16, 1
    %p34 = por %p32, %p33
    %p35 = scmp.ne.s32.totalorder %s24, %s25
    %p36 = scmp.eq.s32.totalorder %s16, 0
    %p37 = por %p35, %p36
    %p38 = scmp.ne.s32.totalorder %s24, %s25
    %p39 = scmp.eq.s32.totalorder %s17, 1
    %p40 = por %p38, %p39
    %p42 = scmp.ne.s32.totalorder %s25, %s41
    %p43 = scmp.eq.s32.totalorder %s17, 0
    %p44 = por %p42, %p43
    %s46 = sadd.s32 %s45, 1
    %p49 = scmp.eq.s32.totalorder %s11, 1
    %p50 = scmp.ne.s32.totalorder %s45, %s47
    %p51 = scmp.eq.s32.totalorder %s11, 0
    %p52 = por %p50, %p51
    %p53 = scmp.ne.s32.totalorder %s45, %s47
    %p54 = scmp.eq.s32.totalorder %s16, 1
    %p55 = por %p53, %p54
    %p56 = scmp.ne.s32.totalorder %s47, %s48
    %p57 = scmp.eq.s32.totalorder %s16, 0
    %p58 = por %p56, %p57
    %p59 = scmp.ne.s32.totalorder %s47, %s48
    %p60 = scmp.eq.s32.totalorder %s17, 1
    %p61 = por %p59, %p60
    %p63 = scmp.ne.s32.totalorder %s48, %s62
    %p64 = scmp.eq.s32.totalorder %s17, 0
    %p65 = por %p63, %p64
    %s67 = sadd.s32 %s66, 1
    %p70 = scmp.eq.s32.totalorder %s11, 1
    %p71 = scmp.ne.s32.totalorder %s66, %s68
    %p72 = scmp.eq.s32.totalorder %s11, 0
    %p73 = por %p71, %p72
    %p74 = scmp.ne.s32.totalorder %s66, %s68
    %p75 = scmp.eq.s32.totalorder %s16, 1
    %p76 = por %p74, %p75
    %p77 = scmp.ne.s32.totalorder %s68, %s69
    %p78 = scmp.eq.s32.totalorder %s16, 0
    %p79 = por %p77, %p78
    %p80 = scmp.ne.s32.totalorder %s68, %s69
    %p81 = scmp.eq.s32.totalorder %s17, 1
    %p82 = por %p80, %p81
    %p84 = scmp.ne.s32.totalorder %s69, %s83
    %p85 = scmp.eq.s32.totalorder %s17, 0
    %p86 = por %p84, %p85
    %s88 = sadd.s32 %s87, 1
    %p91 = scmp.eq.s32.totalorder %s11, 1
    %p92 = scmp.ne.s32.totalorder %s87, %s89
    %p93 = scmp.eq.s32.totalorder %s11, 0
    %p94 = por %p92, %p93
    %p95 = scmp.ne.s32.totalorder %s87, %s89
    %p96 = scmp.eq.s32.totalorder %s16, 1
    %p97 = por %p95, %p96
    %p98 = scmp.ne.s32.totalorder %s89, %s90
    %p99 = scmp.eq.s32.totalorder %s16, 0
    %p100 = por %p98, %p99
    %p101 = scmp.ne.s32.totalorder %s89, %s90
    %p102 = scmp.eq.s32.totalorder %s17, 1
    %p103 = por %p101, %p102
    %p105 = scmp.ne.s32.totalorder %s90, %s104
    %p106 = scmp.eq.s32.totalorder %s17, 0
    %p107 = por %p105, %p106
    %s109 = sadd.s32 %s108, 1
    %p112 = scmp.eq.s32.totalorder %s11, 1
    %p113 = scmp.ne.s32.totalorder %s108, %s110
    %p114 = scmp.eq.s32.totalorder %s11, 0
    %p115 = por %p113, %p114
    %p116 = scmp.ne.s32.totalorder %s108, %s110
    %p117 = scmp.eq.s32.totalorder %s16, 1
    %p118 = por %p116, %p117
    %p119 = scmp.ne.s32.totalorder %s110, %s111
    %p120 = scmp.eq.s32.totalorder %s16, 0
    %p121 = por %p119, %p120
    %p122 = scmp.ne.s32.totalorder %s110, %s111
    %p123 = scmp.eq.s32.totalorder %s17, 1
    %p124 = por %p122, %p123
    %p126 = scmp.ne.s32.totalorder %s111, %s125
    %p127 = scmp.eq.s32.totalorder %s17, 0
    %p128 = por %p126, %p127
    %s129 = ssub.s32 %s11, %s18
    %p130 = scmp.eq.s32.totalorder %s129, 0
    %s132 = sadd.s32 %s131, 1
    %s133 = scalar_select %p130, %s131, %s132
    %p136 = pneg %p130
    %p137 = scmp.eq.s32.totalorder %s11, 1
    %p138 = por %p136, %p137
    %p139 = scmp.ne.s32.totalorder %s131, %s134
    %p140 = scmp.eq.s32.totalorder %s11, 0
    %p141 = por %p139, %p140
    %p142 = scmp.ne.s32.totalorder %s131, %s134
    %p143 = scmp.eq.s32.totalorder %s16, 1
    %p144 = por %p142, %p143
    %p145 = scmp.ne.s32.totalorder %s134, %s135
    %p146 = scmp.eq.s32.totalorder %s16, 0
    %p147 = por %p145, %p146
    %p148 = scmp.ne.s32.totalorder %s134, %s135
    %p149 = scmp.eq.s32.totalorder %s17, 1
    %p150 = por %p148, %p149
    %p152 = scmp.ne.s32.totalorder %s135, %s151
    %p153 = scmp.eq.s32.totalorder %s17, 0
    %p154 = por %p152, %p153
    %p155 = scmp.le.s32.totalorder 1, %s11
    %p156 = scmp.lt.s32.totalorder %s11, 3
    %p157 = pnand %p155, %p156
    %p158 = pneg %p157
    // Predicated region
    $region9: #{down_transition_forward.7} parent=5 // pred_check
      _
    $region10: #{down_transition_forward.7} parent=5 // pred_check_branch
      %160 = sbr.rel (%p157) target = $region12
    $region11: #{down_transition_forward.7} parent=5 // pred_region
      %s161 = ssub.s32 %s11, 1
      // Predicated region
      $region13: #{down_transition_forward.7} parent=11 // pred_check
        %p162 = pneg %p58
      $region14: #{down_transition_forward.7} parent=11 // pred_check_branch
        %164 = sbr.rel (%p162) target = $region16
      $region15: #{down_transition_forward.7} parent=11 // pred_region
        _
      $region16: #{down_transition_forward.7} parent=11 // pred_fallthru
        _
      // Predicated region
      $region17: #{down_transition_forward.7} parent=11 // pred_check
        %p165 = pneg %p79
      $region18: #{down_transition_forward.7} parent=11 // pred_check_branch
        %167 = sbr.rel (%p165) target = $region20
      $region19: #{down_transition_forward.7} parent=11 // pred_region
        _
      $region20: #{down_transition_forward.7} parent=11 // pred_fallthru
        _
      // Predicated region
      $region21: #{down_transition_forward.7} parent=11 // pred_check
        %p168 = pneg %p100
      $region22: #{down_transition_forward.7} parent=11 // pred_check_branch
        %170 = sbr.rel (%p168) target = $region24
      $region23: #{down_transition_forward.7} parent=11 // pred_region
        _
      $region24: #{down_transition_forward.7} parent=11 // pred_fallthru
        _
      // Predicated region
      $region25: #{down_transition_forward.7} parent=11 // pred_check
        %p171 = pneg %p121
      $region26: #{down_transition_forward.7} parent=11 // pred_check_branch
        %173 = sbr.rel (%p171) target = $region28
      $region27: #{down_transition_forward.7} parent=11 // pred_region
        _
      $region28: #{down_transition_forward.7} parent=11 // pred_fallthru
        _
    $region12: #{down_transition_forward.7} parent=5 // pred_fallthru
      _
    %p174 = scmp.lt.s32.totalorder %s11, 2
    // Predicated region
    $region29: #{down_transition_forward.7} parent=5 // pred_check
      %p175 = pneg %p174
    $region30: #{down_transition_forward.7} parent=5 // pred_check_branch
      %177 = sbr.rel (%p175) target = $region32
    $region31: #{down_transition_forward.7} parent=5 // pred_region
      // Predicated region
      $region33: #{down_transition_forward.7} parent=31 // pred_check
        %p178 = pneg %p31
      $region34: #{down_transition_forward.7} parent=31 // pred_check_branch
        %180 = sbr.rel (%p178) target = $region36
      $region35: #{down_transition_forward.7} parent=31 // pred_region
        %s181 = smul.u32 8, %s11
        %p182 = scmp.lt.s32.totalorder %s181, 15
        %s183 = scalar_select %p182, %s181, 15
        %s184 = smul.addr %s183, 8
        %s185 = scalar_lea.vmem %s0, %s184
        %s186 = smul.u32 8, %s11
      $region36: #{down_transition_forward.7} parent=31 // pred_fallthru
        _
    $region32: #{down_transition_forward.7} parent=5 // pred_fallthru
      _
    %p187 = scmp.le.s32.totalorder 1, %s11
    %p188 = scmp.lt.s32.totalorder %s11, 3
    %p189 = pnand %p187, %p188
    %p190 = pneg %p189
    // Predicated region
    $region37: #{down_transition_forward.7} parent=5 // pred_check
      _
    $region38: #{down_transition_forward.7} parent=5 // pred_check_branch
      %192 = sbr.rel (%p189) target = $region40
    $region39: #{down_transition_forward.7} parent=5 // pred_region
      %s193 = ssub.s32 %s11, 1
      %s194 = smul.u32 8, %s16
      %p195 = scmp.lt.s32.totalorder %s194, 15
      %s196 = scalar_select %p195, %s194, 15
      %s197 = smul.addr %s196, 8
      %s198 = scalar_lea.vmem %s0, %s197
      %p199 = pneg %p37
      %p200 = pneg %p34
      %p201 = pneg %p58
      %p202 = pneg %p55
      %p203 = pneg %p79
      %p204 = pneg %p76
      %p205 = pneg %p100
      %p206 = pneg %p97
      %p207 = pneg %p121
      %p208 = pneg %p118
      %p209 = pneg %p147
      %p210 = pneg %p144
      %s211 = smul.u32 8, %s16
      %p212 = scmp.lt.s32.totalorder %s211, 15
      %s213 = scalar_select %p212, %s211, 15
      %s214 = smul.addr %s213, 8
      %s215 = scalar_lea.vmem %s5, %s214
      %s216 = smul.u32 8, %s16
      %p217 = scmp.lt.s32.totalorder %s216, 15
      %s218 = scalar_select %p217, %s216, 15
      %s219 = smul.addr %s218, 8
      %s220 = scalar_lea.vmem %s0, %s219
      %s221 = smul.u32 8, %s16
      %s222 = smul.u32 8, %s16
      %p223 = scmp.lt.s32.totalorder %s222, 15
      %s224 = scalar_select %p223, %s222, 15
      %s225 = smul.addr %s224, 8
      %s226 = scalar_lea.vmem %s5, %s225
      %s227 = smul.u32 8, %s16
      %v228 = vld [vmem:[%s1] sm:$0x1]
      %v229 = vmul.f32 %v228, 0.0078125
      %v230 = vld [vmem:[%s2] sm:$0x1]
      %v231 = vmul.f32 %v230, 0.0078125
      %v232 = vmul.f32 %v229, %v229
      %v233 = vsub.f32 %v231, %v232
      %v234 = vld [vmem:[%s3] sm:$0x1]
      %v235 = vadd.f32 %v233, 1e-05
      %v236 = vrsqrt.pop %v235
      %v237 = vmul.f32 %v236, %v235
      %v238 = vmul.f32 %v237, %v236
      %v239 = vmul.f32 0.5, %v238
      %v240 = vsub.f32 1.5, %v239
      %v241 = vmul.f32 %v236, %v240
      %vm242 = vweird.f32 %v235
      %vm243 = vweird.f32 %v236
      %vm244 = vmor %vm242, %vm243
      %v245 = vsel %vm244, %v236, %v241
      %v246 = vmul.f32 %v234, %v245
      %v247 = vld [vmem:[%s4] sm:$0x1]
      %v248 = vmul.f32 %v229, %v246
      %v249 = vsub.f32 %v247, %v248
      %v250 = vld [vmem:[%s220] sm:$0xff]
      %v251 = vld [vmem:[%s220 + $0x8] sm:$0xff]
      %v252 = vld [vmem:[%s220 + $0x10] sm:$0xff]
      %v253 = vld [vmem:[%s220 + $0x18] sm:$0xff]
      %v254 = vld [vmem:[%s220 + $0x20] sm:$0xff]
      %v255 = vld [vmem:[%s220 + $0x28] sm:$0xff]
      %v256 = vld [vmem:[%s220 + $0x30] sm:$0xff]
      %v257 = vld [vmem:[%s220 + $0x38] sm:$0xff]
      %v259 = vperm.slane %v246, 0
      %v261 = vmul.f32 %v250, %v259
      %v262 = vmul.f32 %v251, %v259
      %v263 = vmul.f32 %v252, %v259
      %v264 = vmul.f32 %v253, %v259
      %v265 = vmul.f32 %v254, %v259
      %v266 = vmul.f32 %v255, %v259
      %v267 = vmul.f32 %v256, %v259
      %v268 = vmul.f32 %v257, %v259
      %v270 = vperm.slane %v249, 0
      %v272 = vadd.f32 %v261, %v270
      %v273 = vadd.f32 %v262, %v270
      %v274 = vadd.f32 %v263, %v270
      %v275 = vadd.f32 %v264, %v270
      %v276 = vadd.f32 %v265, %v270
      %v277 = vadd.f32 %v266, %v270
      %v278 = vadd.f32 %v267, %v270
      %v279 = vadd.f32 %v268, %v270
      %vm280 = vcmp.gt.f32.partialorder %v272, 0.0
      %vm281 = vcmp.gt.f32.partialorder %v273, 0.0
      %vm282 = vcmp.gt.f32.partialorder %v274, 0.0
      %vm283 = vcmp.gt.f32.partialorder %v275, 0.0
      %vm284 = vcmp.gt.f32.partialorder %v276, 0.0
      %vm285 = vcmp.gt.f32.partialorder %v277, 0.0
      %vm286 = vcmp.gt.f32.partialorder %v278, 0.0
      %vm287 = vcmp.gt.f32.partialorder %v279, 0.0
      %v288 = vmin.f32 %v272, 0.0
      %v289 = vmin.f32 %v273, 0.0
      %v290 = vmin.f32 %v274, 0.0
      %v291 = vmin.f32 %v275, 0.0
      %v292 = vmin.f32 %v276, 0.0
      %v293 = vmin.f32 %v277, 0.0
      %v294 = vmin.f32 %v278, 0.0
      %v295 = vmin.f32 %v279, 0.0
      %v296 = vmul.f32 %v288, 1.442695
      %v297 = vpow.pop %v296
      %v298 = vmul.f32 %v289, 1.442695
      %v299 = vpow.pop %v298
      %v300 = vmul.f32 %v290, 1.442695
      %v301 = vpow.pop %v300
      %v302 = vmul.f32 %v291, 1.442695
      %v303 = vpow.pop %v302
      %v304 = vmul.f32 %v292, 1.442695
      %v305 = vpow.pop %v304
      %v306 = vmul.f32 %v293, 1.442695
      %v307 = vpow.pop %v306
      %v308 = vmul.f32 %v294, 1.442695
      %v309 = vpow.pop %v308
      %v310 = vmul.f32 %v295, 1.442695
      %v311 = vpow.pop %v310
      %v312 = vsub.f32 %v297, 1.0
      %v313 = vsub.f32 %v299, 1.0
      %v314 = vsub.f32 %v301, 1.0
      %v315 = vsub.f32 %v303, 1.0
      %v316 = vsub.f32 %v305, 1.0
      %v317 = vsub.f32 %v307, 1.0
      %v318 = vsub.f32 %v309, 1.0
      %v319 = vsub.f32 %v311, 1.0
      %v320 = vsel %vm280, %v272, %v312
      %v321 = vsel %vm281, %v273, %v313
      %v322 = vsel %vm282, %v274, %v314
      %v323 = vsel %vm283, %v275, %v315
      %v324 = vsel %vm284, %v276, %v316
      %v325 = vsel %vm285, %v277, %v317
      %v326 = vsel %vm286, %v278, %v318
      %v327 = vsel %vm287, %v279, %v319
      %vm328 = vcmask 64512
      %329 = vst.msk [vmem:[%s226] sm:$0xff] %vm328, %v320
      %330 = vst.msk [vmem:[%s226 + $0x8] sm:$0xff] %vm328, %v321
      %331 = vst.msk [vmem:[%s226 + $0x10] sm:$0xff] %vm328, %v322
      %332 = vst.msk [vmem:[%s226 + $0x18] sm:$0xff] %vm328, %v323
      %333 = vst.msk [vmem:[%s226 + $0x20] sm:$0xff] %vm328, %v324
      %334 = vst.msk [vmem:[%s226 + $0x28] sm:$0xff] %vm328, %v325
      %335 = vst.msk [vmem:[%s226 + $0x30] sm:$0xff] %vm328, %v326
      %336 = vst.msk [vmem:[%s226 + $0x38] sm:$0xff] %vm328, %v327
      %s337 = smul.u32 8, %s16
      %p338 = scmp.lt.s32.totalorder %s337, 15
      %s339 = scalar_select %p338, %s337, 15
      %s340 = smul.addr %s339, 8
      %s341 = scalar_lea.vmem %s5, %s340
      // Predicated region
      $region41: #{down_transition_forward.7} parent=39 // pred_check
        %p342 = pneg %p144
      $region42: #{down_transition_forward.7} parent=39 // pred_check_branch
        %344 = sbr.rel (%p342) target = $region44
      $region43: #{down_transition_forward.7} parent=39 // pred_region
        %s345 = smul.u32 8, %s16
      $region44: #{down_transition_forward.7} parent=39 // pred_fallthru
        _
    $region40: #{down_transition_forward.7} parent=5 // pred_fallthru
      _
    %p346 = scmp.le.s32.totalorder 2, %s11
    // Predicated region
    $region45: #{down_transition_forward.7} parent=5 // pred_check
      %p347 = pneg %p346
    $region46: #{down_transition_forward.7} parent=5 // pred_check_branch
      %349 = sbr.rel (%p347) target = $region48
    $region47: #{down_transition_forward.7} parent=5 // pred_region
      %s350 = ssub.s32 %s11, 2
      // Predicated region
      $region49: #{down_transition_forward.7} parent=47 // pred_check
        %p351 = pneg %p150
      $region50: #{down_transition_forward.7} parent=47 // pred_check_branch
        %353 = sbr.rel (%p351) target = $region52
      $region51: #{down_transition_forward.7} parent=47 // pred_region
        %s354 = smul.u32 8, %s17
        %p355 = scmp.lt.s32.totalorder %s354, 15
        %s356 = scalar_select %p355, %s354, 15
        %s357 = smul.addr %s356, 8
        %s358 = scalar_lea.vmem %s5, %s357
      $region52: #{down_transition_forward.7} parent=47 // pred_fallthru
        _
    $region48: #{down_transition_forward.7} parent=5 // pred_fallthru
      _
  $region6: #{down_transition_forward.7} parent=0 // loop_footer
    %s15 = sadd.s32 1, %s11
  $region7: #{down_transition_forward.7} parent=0 // loop_footer_branch
    %10 = sbr.rel target = $region3
  $region8: #{down_transition_forward.7} parent=0 // loop_exit
    _

// kernel: down_transition_forward.6
$region0: #{down_transition_forward.6}
  #allocation0 [shape = 'u32[]', space=smem, size = 0x4, offset = 0x4, fixed_abs, tag = 'smem constant byte address 0x4 - core index']
  #allocation1 [shape = 'u32[72,128]{1,0:T(1,128)}', space=vmem, size = 0x9000, scoped, tag = 'internal scratch']
  %s0 = inlined_call_operand.vmem [shape: bf16[128,16], index: 0, kind: input, shape index: {}]
  %s1 = inlined_call_operand.vmem [shape: bf16[16,8], index: 1, kind: input, shape index: {}]
  %s2 = inlined_call_operand.vmem [shape: f32[128,8], index: 2, kind: output, shape index: {0}]
  %s3 = inlined_call_operand.vmem [shape: f32[1,8], index: 3, kind: output, shape index: {1}]
  %s4 = inlined_call_operand.vmem [shape: f32[1,8], index: 4, kind: output, shape index: {2}]
  %5 = xla_tuple %s2, %s3, %s4
  %s6 = sld [smem:[#allocation0]]
  $region61: #{down_transition_forward.6} parent=0
    _
  %s8 = ssub.s32 1, %s6
  %s9 = scalar_select 0, %s8, %s6
  loop: start=0, step=1, limit=4
  $region2: #{down_transition_forward.6} parent=0 // loop_pre_header
    _
  $region3: #{down_transition_forward.6} parent=0 // loop_header
    %s11 = sphi 0, %s15
    %p12 = scmp.ge.s32.totalorder %s11, 4
    %s21 = sphi 0, %s23
    %s24 = sphi 0, %s21
    %s25 = sphi 0, %s24
    %s41 = sphi 0, %s25
    %s45 = sphi 0, %s45
    %s47 = sphi 0, %s45
    %s48 = sphi 0, %s47
    %s62 = sphi 0, %s48
    %s68 = sphi 0, %s70
    %s71 = sphi 0, %s68
    %s72 = sphi 0, %s71
    %s88 = sphi 0, %s72
    %s92 = sphi 0, %s92
    %s94 = sphi 0, %s92
    %s95 = sphi 0, %s94
    %s109 = sphi 0, %s95
    %s113 = sphi 0, %s113
    %s115 = sphi 0, %s113
    %s116 = sphi 0, %s115
    %s130 = sphi 0, %s116
  $region4: #{down_transition_forward.6} parent=0 // loop_header_branch
    %14 = sbr.rel (%p12) target = $region8
  $region5: #{down_transition_forward.6} parent=0 // loop_body
    %s16 = ssub.s32 %s11, 1
    %s17 = ssub.s32 %s11, 2
    %s18 = sadd.s32 %s11, 1
    %s19 = ssub.s32 %s11, %s18
    %p20 = scmp.eq.s32.totalorder %s19, 0
    %s22 = sadd.s32 %s21, 1
    %s23 = scalar_select %p20, %s21, %s22
    %p26 = pneg %p20
    %p27 = scmp.eq.s32.totalorder %s11, 1
    %p28 = por %p26, %p27
    %p29 = scmp.ne.s32.totalorder %s21, %s24
    %p30 = scmp.eq.s32.totalorder %s11, 0
    %p31 = por %p29, %p30
    %p32 = scmp.ne.s32.totalorder %s21, %s24
    %p33 = scmp.eq.s32.totalorder %s16, 1
    %p34 = por %p32, %p33
    %p35 = scmp.ne.s32.totalorder %s24, %s25
    %p36 = scmp.eq.s32.totalorder %s16, 0
    %p37 = por %p35, %p36
    %p38 = scmp.ne.s32.totalorder %s24, %s25
    %p39 = scmp.eq.s32.totalorder %s17, 1
    %p40 = por %p38, %p39
    %p42 = scmp.ne.s32.totalorder %s25, %s41
    %p43 = scmp.eq.s32.totalorder %s17, 0
    %p44 = por %p42, %p43
    %s46 = sadd.s32 %s45, 1
    %p49 = scmp.eq.s32.totalorder %s11, 1
    %p50 = scmp.ne.s32.totalorder %s45, %s47
    %p51 = scmp.eq.s32.totalorder %s11, 0
    %p52 = por %p50, %p51
    %p53 = scmp.ne.s32.totalorder %s45, %s47
    %p54 = scmp.eq.s32.totalorder %s16, 1
    %p55 = por %p53, %p54
    %p56 = scmp.ne.s32.totalorder %s47, %s48
    %p57 = scmp.eq.s32.totalorder %s16, 0
    %p58 = por %p56, %p57
    %p59 = scmp.ne.s32.totalorder %s47, %s48
    %p60 = scmp.eq.s32.totalorder %s17, 1
    %p61 = por %p59, %p60
    %p63 = scmp.ne.s32.totalorder %s48, %s62
    %p64 = scmp.eq.s32.totalorder %s17, 0
    %p65 = por %p63, %p64
    %s66 = ssub.s32 %s11, %s18
    %p67 = scmp.eq.s32.totalorder %s66, 0
    %s69 = sadd.s32 %s68, 1
    %s70 = scalar_select %p67, %s68, %s69
    %p73 = pneg %p67
    %p74 = scmp.eq.s32.totalorder %s11, 1
    %p75 = por %p73, %p74
    %p76 = scmp.ne.s32.totalorder %s68, %s71
    %p77 = scmp.eq.s32.totalorder %s11, 0
    %p78 = por %p76, %p77
    %p79 = scmp.ne.s32.totalorder %s68, %s71
    %p80 = scmp.eq.s32.totalorder %s16, 1
    %p81 = por %p79, %p80
    %p82 = scmp.ne.s32.totalorder %s71, %s72
    %p83 = scmp.eq.s32.totalorder %s16, 0
    %p84 = por %p82, %p83
    %p85 = scmp.ne.s32.totalorder %s71, %s72
    %p86 = scmp.eq.s32.totalorder %s17, 1
    %p87 = por %p85, %p86
    %p89 = scmp.ne.s32.totalorder %s72, %s88
    %p90 = scmp.eq.s32.totalorder %s17, 0
    %p91 = por %p89, %p90
    %s93 = sadd.s32 %s92, 1
    %p96 = scmp.eq.s32.totalorder %s11, 1
    %p97 = scmp.ne.s32.totalorder %s92, %s94
    %p98 = scmp.eq.s32.totalorder %s11, 0
    %p99 = por %p97, %p98
    %p100 = scmp.ne.s32.totalorder %s92, %s94
    %p101 = scmp.eq.s32.totalorder %s16, 1
    %p102 = por %p100, %p101
    %p103 = scmp.ne.s32.totalorder %s94, %s95
    %p104 = scmp.eq.s32.totalorder %s16, 0
    %p105 = por %p103, %p104
    %p106 = scmp.ne.s32.totalorder %s94, %s95
    %p107 = scmp.eq.s32.totalorder %s17, 1
    %p108 = por %p106, %p107
    %p110 = scmp.ne.s32.totalorder %s95, %s109
    %p111 = scmp.eq.s32.totalorder %s17, 0
    %p112 = por %p110, %p111
    %s114 = sadd.s32 %s113, 1
    %p117 = scmp.eq.s32.totalorder %s11, 1
    %p118 = scmp.ne.s32.totalorder %s113, %s115
    %p119 = scmp.eq.s32.totalorder %s11, 0
    %p120 = por %p118, %p119
    %p121 = scmp.ne.s32.totalorder %s113, %s115
    %p122 = scmp.eq.s32.totalorder %s16, 1
    %p123 = por %p121, %p122
    %p124 = scmp.ne.s32.totalorder %s115, %s116
    %p125 = scmp.eq.s32.totalorder %s16, 0
    %p126 = por %p124, %p125
    %p127 = scmp.ne.s32.totalorder %s115, %s116
    %p128 = scmp.eq.s32.totalorder %s17, 1
    %p129 = por %p127, %p128
    %p131 = scmp.ne.s32.totalorder %s116, %s130
    %p132 = scmp.eq.s32.totalorder %s17, 0
    %p133 = por %p131, %p132
    %p134 = scmp.le.s32.totalorder 1, %s11
    %p135 = scmp.lt.s32.totalorder %s11, 3
    %p136 = pnand %p134, %p135
    %p137 = pneg %p136
    // Predicated region
    $region9: #{down_transition_forward.6} parent=5 // pred_check
      _
    $region10: #{down_transition_forward.6} parent=5 // pred_check_branch
      %139 = sbr.rel (%p136) target = $region12
    $region11: #{down_transition_forward.6} parent=5 // pred_region
      %s140 = ssub.s32 %s11, 1
      // Predicated region
      $region13: #{down_transition_forward.6} parent=11 // pred_check
        %p141 = pneg %p58
      $region14: #{down_transition_forward.6} parent=11 // pred_check_branch
        %143 = sbr.rel (%p141) target = $region16
      $region15: #{down_transition_forward.6} parent=11 // pred_region
        _
      $region16: #{down_transition_forward.6} parent=11 // pred_fallthru
        _
    $region12: #{down_transition_forward.6} parent=5 // pred_fallthru
      _
    %p144 = scmp.lt.s32.totalorder %s11, 2
    // Predicated region
    $region17: #{down_transition_forward.6} parent=5 // pred_check
      %p145 = pneg %p144
    $region18: #{down_transition_forward.6} parent=5 // pred_check_branch
      %147 = sbr.rel (%p145) target = $region20
    $region19: #{down_transition_forward.6} parent=5 // pred_region
      // Predicated region
      $region21: #{down_transition_forward.6} parent=19 // pred_check
        %p148 = pneg %p31
      $region22: #{down_transition_forward.6} parent=19 // pred_check_branch
        %150 = sbr.rel (%p148) target = $region24
      $region23: #{down_transition_forward.6} parent=19 // pred_region
        %s151 = smul.u32 8, %s11
        %p152 = scmp.lt.s32.totalorder %s151, 15
        %s153 = scalar_select %p152, %s151, 15
        %s154 = smul.addr %s153, 4
        %s155 = scalar_lea.vmem %s0, %s154
        %s156 = smul.u32 8, %s11
      $region24: #{down_transition_forward.6} parent=19 // pred_fallthru
        _
    $region20: #{down_transition_forward.6} parent=5 // pred_fallthru
      _
    %p157 = scmp.le.s32.totalorder 1, %s11
    %p158 = scmp.lt.s32.totalorder %s11, 3
    %p159 = pnand %p157, %p158
    %p160 = pneg %p159
    // Predicated region
    $region25: #{down_transition_forward.6} parent=5 // pred_check
      _
    $region26: #{down_transition_forward.6} parent=5 // pred_check_branch
      %162 = sbr.rel (%p159) target = $region28
    $region27: #{down_transition_forward.6} parent=5 // pred_region
      %s163 = ssub.s32 %s11, 1
      %s164 = smul.u32 8, %s16
      %p165 = scmp.lt.s32.totalorder %s164, 15
      %s166 = scalar_select %p165, %s164, 15
      %s167 = smul.addr %s166, 4
      %s168 = scalar_lea.vmem %s0, %s167
      %p169 = pneg %p37
      %p170 = pneg %p34
      %p171 = pneg %p58
      %p172 = pneg %p55
      %p173 = pneg %p84
      %p174 = pneg %p81
      %s175 = smul.u32 8, %s16
      %p176 = scmp.lt.s32.totalorder %s175, 15
      %s177 = scalar_select %p176, %s175, 15
      %s178 = smul.addr %s177, 8
      %s179 = scalar_lea.vmem %s2, %s178
      %p180 = pneg %p105
      %p181 = pneg %p102
      %p182 = pneg %p126
      %p183 = pneg %p123
      %s184 = smul.u32 8, %s16
      %p185 = scmp.lt.s32.totalorder %s184, 15
      %s186 = scalar_select %p185, %s184, 15
      %s187 = smul.addr %s186, 4
      %s188 = scalar_lea.vmem %s0, %s187
      %s189 = smul.u32 8, %s16
      %s190 = smul.u32 8, %s16
      %p191 = scmp.lt.s32.totalorder %s190, 15
      %s192 = scalar_select %p191, %s190, 15
      %s193 = smul.addr %s192, 8
      %s194 = scalar_lea.vmem %s2, %s193
      %s195 = smul.u32 8, %s16
      %v197 = vld [vmem:[%s188] sm:$0xf]
      %v198 = vld [vmem:[%s188 + $0x4] sm:$0xf]
      %v199 = vld [vmem:[%s188 + $0x8] sm:$0xf]
      %v200 = vld [vmem:[%s188 + $0xc] sm:$0xf]
      %v201 = vld [vmem:[%s188 + $0x10] sm:$0xf]
      %v202 = vld [vmem:[%s188 + $0x14] sm:$0xf]
      %v203 = vld [vmem:[%s188 + $0x18] sm:$0xf]
      %v204 = vld [vmem:[%s188 + $0x1c] sm:$0xf]
      %v205 = vld [vmem:[%s1] sm:$0xf]
      %v206 = vld [vmem:[%s1 + $0x4] sm:$0xf]
      %v215 = vunpack.c.l.b16 %v197
      %v216 = vunpack.c.l.b16 %v198
      %v217 = vunpack.c.l.b16 %v199
      %v218 = vunpack.c.l.b16 %v200
      %v219 = vunpack.c.l.b16 %v201
      %v220 = vunpack.c.l.b16 %v202
      %v221 = vunpack.c.l.b16 %v203
      %v222 = vunpack.c.l.b16 %v204
      %v223 = vpack.c.b16 %v216, %v215
      %v224 = vpack.c.b16 %v218, %v217
      %v225 = vpack.c.b16 %v220, %v219
      %v226 = vpack.c.b16 %v222, %v221
      %v229 = vunpack.c.l.b16 %v205
      %v230 = vunpack.c.l.b16 %v206
      %v231 = vpack.c.b16 %v230, %v229
      %vm233 = vcmask 130048
      %v235 = vsel %vm233, %v223, 0
      %v238 = vsel %vm233, %v224, 0
      %v241 = vsel %vm233, %v225, 0
      %v244 = vsel %vm233, %v226, 0
      %246 = vmatpush.bf16.msra.mxu0 0
      %247 = vmatpush.bf16.msra.mxu0 0
      %248 = vmatpush.bf16.msra.mxu0 0
      %249 = vmatpush.bf16.msra.mxu0 0
      %250 = vmatpush.bf16.msra.mxu0 0
      %251 = vmatpush.bf16.msra.mxu0 0
      %252 = vmatpush.bf16.msra.mxu0 0
      %253 = vmatpush.bf16.msra.mxu0 %v231
      %254 = vmatmul.bf16.gmra.mxu0 %v235
      %v255 = vpop.f32.mrf.mxu0
      %v256 = vadd.f32 0.0, %v255
      %v257 = vpop.f32.mrf.mxu0
      %v258 = vadd.f32 0.0, %v257
      %259 = vmatmul.bf16.gmra.mxu0 %v238
      %v260 = vpop.f32.mrf.mxu0
      %v261 = vadd.f32 0.0, %v260
      %v262 = vpop.f32.mrf.mxu0
      %v263 = vadd.f32 0.0, %v262
      %264 = vmatmul.bf16.gmra.mxu0 %v241
      %v265 = vpop.f32.mrf.mxu0
      %v266 = vadd.f32 0.0, %v265
      %v267 = vpop.f32.mrf.mxu0
      %v268 = vadd.f32 0.0, %v267
      %269 = vmatmul.bf16.gmra.mxu0 %v244
      %v270 = vpop.f32.mrf.mxu0
      %v271 = vadd.f32 0.0, %v270
      %v272 = vpop.f32.mrf.mxu0
      %v273 = vadd.f32 0.0, %v272
      %274 = vdwg.mxu0
      %vm275 = vcmask 64512
      %276 = vst.msk [vmem:[%s194] sm:$0xff] %vm275, %v256
      %277 = vst.msk [vmem:[%s194 + $0x8] sm:$0xff] %vm275, %v258
      %278 = vst.msk [vmem:[%s194 + $0x10] sm:$0xff] %vm275, %v261
      %279 = vst.msk [vmem:[%s194 + $0x18] sm:$0xff] %vm275, %v263
      %280 = vst.msk [vmem:[%s194 + $0x20] sm:$0xff] %vm275, %v266
      %281 = vst.msk [vmem:[%s194 + $0x28] sm:$0xff] %vm275, %v268
      %282 = vst.msk [vmem:[%s194 + $0x30] sm:$0xff] %vm275, %v271
      %283 = vst.msk [vmem:[%s194 + $0x38] sm:$0xff] %vm275, %v273
      %p284 = scmp.eq.s32.totalorder %s16, 0
      // Predicated region
      $region29: #{down_transition_forward.6} parent=27 // pred_check
        %p285 = pneg %p284
      $region30: #{down_transition_forward.6} parent=27 // pred_check_branch
        %287 = sbr.rel (%p285) target = $region32
      $region31: #{down_transition_forward.6} parent=27 // pred_region
        %vm288 = vcmask 57344
        %289 = vst.msk [vmem:[%s3] sm:$0x1] %vm288, 0.0
        %290 = vst.msk [vmem:[%s4] sm:$0x1] %vm288, 0.0
      $region32: #{down_transition_forward.6} parent=27 // pred_fallthru
        _
      %v291 = vld [vmem:[%s3] sm:$0x1]
      %v292 = vsel %vm275, %v256, 0.0
      %v293 = vsel %vm275, %v258, 0.0
      %v294 = vadd.f32 %v292, %v293
      %v295 = vsel %vm275, %v261, 0.0
      %v296 = vadd.f32 %v294, %v295
      %v297 = vsel %vm275, %v263, 0.0
      %v298 = vadd.f32 %v296, %v297
      %v299 = vsel %vm275, %v266, 0.0
      %v300 = vadd.f32 %v298, %v299
      %v301 = vsel %vm275, %v268, 0.0
      %v302 = vadd.f32 %v300, %v301
      %v303 = vsel %vm275, %v271, 0.0
      %v304 = vadd.f32 %v302, %v303
      %v305 = vsel %vm275, %v273, 0.0
      %v306 = vadd.f32 %v304, %v305
      %v307 = vrot.slane %v306, 4
      %v308 = vadd.f32 %v306, %v307
      %v309 = vrot.slane %v308, 2
      %v310 = vadd.f32 %v308, %v309
      %v311 = vrot.slane %v310, 1
      %v312 = vadd.f32 %v310, %v311
      %v313 = vadd.f32 %v291, %v312
      %vm314 = vcmask 57344
      %315 = vst.msk [vmem:[%s3] sm:$0x1] %vm314, %v313
      %v316 = vld [vmem:[%s4] sm:$0x1]
      %v317 = vmul.f32 %v256, %v256
      %v318 = vmul.f32 %v258, %v258
      %v319 = vmul.f32 %v261, %v261
      %v320 = vmul.f32 %v263, %v263
      %v321 = vmul.f32 %v266, %v266
      %v322 = vmul.f32 %v268, %v268
      %v323 = vmul.f32 %v271, %v271
      %v324 = vmul.f32 %v273, %v273
      %v325 = vsel %vm275, %v317, 0.0
      %v326 = vsel %vm275, %v318, 0.0
      %v327 = vadd.f32 %v325, %v326
      %v328 = vsel %vm275, %v319, 0.0
      %v329 = vadd.f32 %v327, %v328
      %v330 = vsel %vm275, %v320, 0.0
      %v331 = vadd.f32 %v329, %v330
      %v332 = vsel %vm275, %v321, 0.0
      %v333 = vadd.f32 %v331, %v332
      %v334 = vsel %vm275, %v322, 0.0
      %v335 = vadd.f32 %v333, %v334
      %v336 = vsel %vm275, %v323, 0.0
      %v337 = vadd.f32 %v335, %v336
      %v338 = vsel %vm275, %v324, 0.0
      %v339 = vadd.f32 %v337, %v338
      %v340 = vrot.slane %v339, 4
      %v341 = vadd.f32 %v339, %v340
      %v342 = vrot.slane %v341, 2
      %v343 = vadd.f32 %v341, %v342
      %v344 = vrot.slane %v343, 1
      %v345 = vadd.f32 %v343, %v344
      %v346 = vadd.f32 %v316, %v345
      %347 = vst.msk [vmem:[%s4] sm:$0x1] %vm314, %v346
      %s348 = smul.u32 8, %s16
      %p349 = scmp.lt.s32.totalorder %s348, 15
      %s350 = scalar_select %p349, %s348, 15
      %s351 = smul.addr %s350, 8
      %s352 = scalar_lea.vmem %s2, %s351
      // Predicated region
      $region33: #{down_transition_forward.6} parent=27 // pred_check
        %p353 = pneg %p81
      $region34: #{down_transition_forward.6} parent=27 // pred_check_branch
        %355 = sbr.rel (%p353) target = $region36
      $region35: #{down_transition_forward.6} parent=27 // pred_region
        %s356 = smul.u32 8, %s16
      $region36: #{down_transition_forward.6} parent=27 // pred_fallthru
        _
      // Predicated region
      $region37: #{down_transition_forward.6} parent=27 // pred_check
        %p357 = pneg %p102
      $region38: #{down_transition_forward.6} parent=27 // pred_check_branch
        %359 = sbr.rel (%p357) target = $region40
      $region39: #{down_transition_forward.6} parent=27 // pred_region
        _
      $region40: #{down_transition_forward.6} parent=27 // pred_fallthru
        _
      // Predicated region
      $region41: #{down_transition_forward.6} parent=27 // pred_check
        %p360 = pneg %p123
      $region42: #{down_transition_forward.6} parent=27 // pred_check_branch
        %362 = sbr.rel (%p360) target = $region44
      $region43: #{down_transition_forward.6} parent=27 // pred_region
        _
      $region44: #{down_transition_forward.6} parent=27 // pred_fallthru
        _
      // Predicated region
      $region45: #{down_transition_forward.6} parent=27 // pred_check
        %p363 = pneg %p102
      $region46: #{down_transition_forward.6} parent=27 // pred_check_branch
        %365 = sbr.rel (%p363) target = $region48
      $region47: #{down_transition_forward.6} parent=27 // pred_region
        _
      $region48: #{down_transition_forward.6} parent=27 // pred_fallthru
        _
      // Predicated region
      $region49: #{down_transition_forward.6} parent=27 // pred_check
        %p366 = pneg %p123
      $region50: #{down_transition_forward.6} parent=27 // pred_check_branch
        %368 = sbr.rel (%p366) target = $region52
      $region51: #{down_transition_forward.6} parent=27 // pred_region
        _
      $region52: #{down_transition_forward.6} parent=27 // pred_fallthru
        _
    $region28: #{down_transition_forward.6} parent=5 // pred_fallthru
      _
    %p369 = scmp.le.s32.totalorder 2, %s11
    // Predicated region
    $region53: #{down_transition_forward.6} parent=5 // pred_check
      %p370 = pneg %p369
    $region54: #{down_transition_forward.6} parent=5 // pred_check_branch
      %372 = sbr.rel (%p370) target = $region56
    $region55: #{down_transition_forward.6} parent=5 // pred_region
      %s373 = ssub.s32 %s11, 2
      // Predicated region
      $region57: #{down_transition_forward.6} parent=55 // pred_check
        %p374 = pneg %p87
      $region58: #{down_transition_forward.6} parent=55 // pred_check_branch
        %376 = sbr.rel (%p374) target = $region60
      $region59: #{down_transition_forward.6} parent=55 // pred_region
        %s377 = smul.u32 8, %s17
        %p378 = scmp.lt.s32.totalorder %s377, 15
        %s379 = scalar_select %p378, %s377, 15
        %s380 = smul.addr %s379, 8
        %s381 = scalar_lea.vmem %s2, %s380
      $region60: #{down_transition_forward.6} parent=55 // pred_fallthru
        _
    $region56: #{down_transition_forward.6} parent=5 // pred_fallthru
      _
  $region6: #{down_transition_forward.6} parent=0 // loop_footer
    %s15 = sadd.s32 1, %s11
  $region7: #{down_transition_forward.6} parent=0 // loop_footer_branch
    %10 = sbr.rel target = $region3
  $region8: #{down_transition_forward.6} parent=0 // loop_exit
    _

// kernel: down_transition_forward.8
$region0: #{down_transition_forward.8}
  #allocation0 [shape = 'u32[]', space=smem, size = 0x4, offset = 0x4, fixed_abs, tag = 'smem constant byte address 0x4 - core index']
  #allocation1 [shape = 'u32[72,128]{1,0:T(1,128)}', space=vmem, size = 0x9000, scoped, tag = 'internal scratch']
  %s0 = inlined_call_operand.vmem [shape: bf16[128,200], index: 0, kind: input, shape index: {}]
  %s1 = inlined_call_operand.vmem [shape: bf16[200,8], index: 1, kind: input, shape index: {}]
  %s2 = inlined_call_operand.vmem [shape: f32[128,8], index: 2, kind: output, shape index: {0}]
  %s3 = inlined_call_operand.vmem [shape: f32[1,8], index: 3, kind: output, shape index: {1}]
  %s4 = inlined_call_operand.vmem [shape: f32[1,8], index: 4, kind: output, shape index: {2}]
  %5 = xla_tuple %s2, %s3, %s4
  %s6 = sld [smem:[#allocation0]]
  $region61: #{down_transition_forward.8} parent=0
    _
  %s8 = ssub.s32 1, %s6
  %s9 = scalar_select 0, %s8, %s6
  loop: start=0, step=1, limit=4
  $region2: #{down_transition_forward.8} parent=0 // loop_pre_header
    _
  $region3: #{down_transition_forward.8} parent=0 // loop_header
    %s11 = sphi 0, %s15
    %p12 = scmp.ge.s32.totalorder %s11, 4
    %s21 = sphi 0, %s23
    %s24 = sphi 0, %s21
    %s25 = sphi 0, %s24
    %s41 = sphi 0, %s25
    %s45 = sphi 0, %s45
    %s47 = sphi 0, %s45
    %s48 = sphi 0, %s47
    %s62 = sphi 0, %s48
    %s68 = sphi 0, %s70
    %s71 = sphi 0, %s68
    %s72 = sphi 0, %s71
    %s88 = sphi 0, %s72
    %s92 = sphi 0, %s92
    %s94 = sphi 0, %s92
    %s95 = sphi 0, %s94
    %s109 = sphi 0, %s95
    %s113 = sphi 0, %s113
    %s115 = sphi 0, %s113
    %s116 = sphi 0, %s115
    %s130 = sphi 0, %s116
  $region4: #{down_transition_forward.8} parent=0 // loop_header_branch
    %14 = sbr.rel (%p12) target = $region8
  $region5: #{down_transition_forward.8} parent=0 // loop_body
    %s16 = ssub.s32 %s11, 1
    %s17 = ssub.s32 %s11, 2
    %s18 = sadd.s32 %s11, 1
    %s19 = ssub.s32 %s11, %s18
    %p20 = scmp.eq.s32.totalorder %s19, 0
    %s22 = sadd.s32 %s21, 1
    %s23 = scalar_select %p20, %s21, %s22
    %p26 = pneg %p20
    %p27 = scmp.eq.s32.totalorder %s11, 1
    %p28 = por %p26, %p27
    %p29 = scmp.ne.s32.totalorder %s21, %s24
    %p30 = scmp.eq.s32.totalorder %s11, 0
    %p31 = por %p29, %p30
    %p32 = scmp.ne.s32.totalorder %s21, %s24
    %p33 = scmp.eq.s32.totalorder %s16, 1
    %p34 = por %p32, %p33
    %p35 = scmp.ne.s32.totalorder %s24, %s25
    %p36 = scmp.eq.s32.totalorder %s16, 0
    %p37 = por %p35, %p36
    %p38 = scmp.ne.s32.totalorder %s24, %s25
    %p39 = scmp.eq.s32.totalorder %s17, 1
    %p40 = por %p38, %p39
    %p42 = scmp.ne.s32.totalorder %s25, %s41
    %p43 = scmp.eq.s32.totalorder %s17, 0
    %p44 = por %p42, %p43
    %s46 = sadd.s32 %s45, 1
    %p49 = scmp.eq.s32.totalorder %s11, 1
    %p50 = scmp.ne.s32.totalorder %s45, %s47
    %p51 = scmp.eq.s32.totalorder %s11, 0
    %p52 = por %p50, %p51
    %p53 = scmp.ne.s32.totalorder %s45, %s47
    %p54 = scmp.eq.s32.totalorder %s16, 1
    %p55 = por %p53, %p54
    %p56 = scmp.ne.s32.totalorder %s47, %s48
    %p57 = scmp.eq.s32.totalorder %s16, 0
    %p58 = por %p56, %p57
    %p59 = scmp.ne.s32.totalorder %s47, %s48
    %p60 = scmp.eq.s32.totalorder %s17, 1
    %p61 = por %p59, %p60
    %p63 = scmp.ne.s32.totalorder %s48, %s62
    %p64 = scmp.eq.s32.totalorder %s17, 0
    %p65 = por %p63, %p64
    %s66 = ssub.s32 %s11, %s18
    %p67 = scmp.eq.s32.totalorder %s66, 0
    %s69 = sadd.s32 %s68, 1
    %s70 = scalar_select %p67, %s68, %s69
    %p73 = pneg %p67
    %p74 = scmp.eq.s32.totalorder %s11, 1
    %p75 = por %p73, %p74
    %p76 = scmp.ne.s32.totalorder %s68, %s71
    %p77 = scmp.eq.s32.totalorder %s11, 0
    %p78 = por %p76, %p77
    %p79 = scmp.ne.s32.totalorder %s68, %s71
    %p80 = scmp.eq.s32.totalorder %s16, 1
    %p81 = por %p79, %p80
    %p82 = scmp.ne.s32.totalorder %s71, %s72
    %p83 = scmp.eq.s32.totalorder %s16, 0
    %p84 = por %p82, %p83
    %p85 = scmp.ne.s32.totalorder %s71, %s72
    %p86 = scmp.eq.s32.totalorder %s17, 1
    %p87 = por %p85, %p86
    %p89 = scmp.ne.s32.totalorder %s72, %s88
    %p90 = scmp.eq.s32.totalorder %s17, 0
    %p91 = por %p89, %p90
    %s93 = sadd.s32 %s92, 1
    %p96 = scmp.eq.s32.totalorder %s11, 1
    %p97 = scmp.ne.s32.totalorder %s92, %s94
    %p98 = scmp.eq.s32.totalorder %s11, 0
    %p99 = por %p97, %p98
    %p100 = scmp.ne.s32.totalorder %s92, %s94
    %p101 = scmp.eq.s32.totalorder %s16, 1
    %p102 = por %p100, %p101
    %p103 = scmp.ne.s32.totalorder %s94, %s95
    %p104 = scmp.eq.s32.totalorder %s16, 0
    %p105 = por %p103, %p104
    %p106 = scmp.ne.s32.totalorder %s94, %s95
    %p107 = scmp.eq.s32.totalorder %s17, 1
    %p108 = por %p106, %p107
    %p110 = scmp.ne.s32.totalorder %s95, %s109
    %p111 = scmp.eq.s32.totalorder %s17, 0
    %p112 = por %p110, %p111
    %s114 = sadd.s32 %s113, 1
    %p117 = scmp.eq.s32.totalorder %s11, 1
    %p118 = scmp.ne.s32.totalorder %s113, %s115
    %p119 = scmp.eq.s32.totalorder %s11, 0
    %p120 = por %p118, %p119
    %p121 = scmp.ne.s32.totalorder %s113, %s115
    %p122 = scmp.eq.s32.totalorder %s16, 1
    %p123 = por %p121, %p122
    %p124 = scmp.ne.s32.totalorder %s115, %s116
    %p125 = scmp.eq.s32.totalorder %s16, 0
    %p126 = por %p124, %p125
    %p127 = scmp.ne.s32.totalorder %s115, %s116
    %p128 = scmp.eq.s32.totalorder %s17, 1
    %p129 = por %p127, %p128
    %p131 = scmp.ne.s32.totalorder %s116, %s130
    %p132 = scmp.eq.s32.totalorder %s17, 0
    %p133 = por %p131, %p132
    %p134 = scmp.le.s32.totalorder 1, %s11
    %p135 = scmp.lt.s32.totalorder %s11, 3
    %p136 = pnand %p134, %p135
    %p137 = pneg %p136
    // Predicated region
    $region9: #{down_transition_forward.8} parent=5 // pred_check
      _
    $region10: #{down_transition_forward.8} parent=5 // pred_check_branch
      %139 = sbr.rel (%p136) target = $region12
    $region11: #{down_transition_forward.8} parent=5 // pred_region
      %s140 = ssub.s32 %s11, 1
      // Predicated region
      $region13: #{down_transition_forward.8} parent=11 // pred_check
        %p141 = pneg %p58
      $region14: #{down_transition_forward.8} parent=11 // pred_check_branch
        %143 = sbr.rel (%p141) target = $region16
      $region15: #{down_transition_forward.8} parent=11 // pred_region
        _
      $region16: #{down_transition_forward.8} parent=11 // pred_fallthru
        _
    $region12: #{down_transition_forward.8} parent=5 // pred_fallthru
      _
    %p144 = scmp.lt.s32.totalorder %s11, 2
    // Predicated region
    $region17: #{down_transition_forward.8} parent=5 // pred_check
      %p145 = pneg %p144
    $region18: #{down_transition_forward.8} parent=5 // pred_check_branch
      %147 = sbr.rel (%p145) target = $region20
    $region19: #{down_transition_forward.8} parent=5 // pred_region
      // Predicated region
      $region21: #{down_transition_forward.8} parent=19 // pred_check
        %p148 = pneg %p31
      $region22: #{down_transition_forward.8} parent=19 // pred_check_branch
        %150 = sbr.rel (%p148) target = $region24
      $region23: #{down_transition_forward.8} parent=19 // pred_region
        %s151 = smul.u32 8, %s11
        %p152 = scmp.lt.s32.totalorder %s151, 15
        %s153 = scalar_select %p152, %s151, 15
        %s154 = smul.addr %s153, 2
        %s155 = smul.addr %s154, 4
        %s156 = scalar_lea.vmem %s0, %s155
        %s157 = smul.u32 8, %s11
      $region24: #{down_transition_forward.8} parent=19 // pred_fallthru
        _
    $region20: #{down_transition_forward.8} parent=5 // pred_fallthru
      _
    %p158 = scmp.le.s32.totalorder 1, %s11
    %p159 = scmp.lt.s32.totalorder %s11, 3
    %p160 = pnand %p158, %p159
    %p161 = pneg %p160
    // Predicated region
    $region25: #{down_transition_forward.8} parent=5 // pred_check
      _
    $region26: #{down_transition_forward.8} parent=5 // pred_check_branch
      %163 = sbr.rel (%p160) target = $region28
    $region27: #{down_transition_forward.8} parent=5 // pred_region
      %s164 = ssub.s32 %s11, 1
      %s165 = smul.u32 8, %s16
      %p166 = scmp.lt.s32.totalorder %s165, 15
      %s167 = scalar_select %p166, %s165, 15
      %s168 = smul.addr %s167, 2
      %s169 = smul.addr %s168, 4
      %s170 = scalar_lea.vmem %s0, %s169
      %p171 = pneg %p37
      %p172 = pneg %p34
      %p173 = pneg %p58
      %p174 = pneg %p55
      %p175 = pneg %p84
      %p176 = pneg %p81
      %s177 = smul.u32 8, %s16
      %p178 = scmp.lt.s32.totalorder %s177, 15
      %s179 = scalar_select %p178, %s177, 15
      %s180 = smul.addr %s179, 8
      %s181 = scalar_lea.vmem %s2, %s180
      %p182 = pneg %p105
      %p183 = pneg %p102
      %p184 = pneg %p126
      %p185 = pneg %p123
      %s186 = smul.u32 8, %s16
      %p187 = scmp.lt.s32.totalorder %s186, 15
      %s188 = scalar_select %p187, %s186, 15
      %s189 = smul.addr %s188, 2
      %s190 = smul.addr %s189, 4
      %s191 = scalar_lea.vmem %s0, %s190
      %s192 = smul.u32 8, %s16
      %s193 = smul.u32 8, %s16
      %p194 = scmp.lt.s32.totalorder %s193, 15
      %s195 = scalar_select %p194, %s193, 15
      %s196 = smul.addr %s195, 8
      %s197 = scalar_lea.vmem %s2, %s196
      %s198 = smul.u32 8, %s16
      %v200 = vld [vmem:[%s191] sm:$0xff]
      %v201 = vld [vmem:[%s191 + $0x8] sm:$0xff]
      %v202 = vld [vmem:[%s191 + $0x10] sm:$0xff]
      %v203 = vld [vmem:[%s191 + $0x18] sm:$0xff]
      %v204 = vld [vmem:[%s191 + $0x20] sm:$0xff]
      %v205 = vld [vmem:[%s191 + $0x28] sm:$0xff]
      %v206 = vld [vmem:[%s191 + $0x30] sm:$0xff]
      %v207 = vld [vmem:[%s191 + $0x38] sm:$0xff]
      %v208 = vld [vmem:[%s1] sm:$0xf]
      %v209 = vld [vmem:[%s1 + $0x4] sm:$0xf]
      %v210 = vld [vmem:[%s1 + $0x8] sm:$0xf]
      %v211 = vld [vmem:[%s1 + $0xc] sm:$0xf]
      %v212 = vld [vmem:[%s1 + $0x10] sm:$0xf]
      %v213 = vld [vmem:[%s1 + $0x14] sm:$0xf]
      %v214 = vld [vmem:[%s1 + $0x18] sm:$0xf]
      %v215 = vld [vmem:[%s1 + $0x1c] sm:$0xf]
      %v216 = vld [vmem:[%s1 + $0x20] sm:$0xf]
      %v217 = vld [vmem:[%s1 + $0x24] sm:$0xf]
      %v218 = vld [vmem:[%s1 + $0x28] sm:$0xf]
      %v219 = vld [vmem:[%s1 + $0x2c] sm:$0xf]
      %v220 = vld [vmem:[%s1 + $0x30] sm:$0xf]
      %v221 = vld [vmem:[%s1 + $0x34] sm:$0xf]
      %v222 = vld [vmem:[%s1 + $0x38] sm:$0xf]
      %v223 = vld [vmem:[%s1 + $0x3c] sm:$0xf]
      %v224 = vld [vmem:[%s1 + $0x40] sm:$0xf]
      %v225 = vld [vmem:[%s1 + $0x44] sm:$0xf]
      %v226 = vld [vmem:[%s1 + $0x48] sm:$0xf]
      %v227 = vld [vmem:[%s1 + $0x4c] sm:$0xf]
      %v228 = vld [vmem:[%s1 + $0x50] sm:$0xf]
      %v229 = vld [vmem:[%s1 + $0x54] sm:$0xf]
      %v230 = vld [vmem:[%s1 + $0x58] sm:$0xf]
      %v231 = vld [vmem:[%s1 + $0x5c] sm:$0xf]
      %v232 = vld [vmem:[%s1 + $0x60] sm:$0xf]
      %v241 = vunpack.c.l.b16 %v200
      %v242 = vunpack.c.h.b16 %v200
      %v243 = vunpack.c.l.b16 %v201
      %v244 = vunpack.c.h.b16 %v201
      %v245 = vunpack.c.l.b16 %v202
      %v246 = vunpack.c.h.b16 %v202
      %v247 = vunpack.c.l.b16 %v203
      %v248 = vunpack.c.h.b16 %v203
      %v249 = vunpack.c.l.b16 %v204
      %v250 = vunpack.c.h.b16 %v204
      %v251 = vunpack.c.l.b16 %v205
      %v252 = vunpack.c.h.b16 %v205
      %v253 = vunpack.c.l.b16 %v206
      %v254 = vunpack.c.h.b16 %v206
      %v255 = vunpack.c.l.b16 %v207
      %v256 = vunpack.c.h.b16 %v207
      %v257 = vpack.c.b16 %v243, %v241
      %v258 = vpack.c.b16 %v244, %v242
      %v259 = vpack.c.b16 %v247, %v245
      %v260 = vpack.c.b16 %v248, %v246
      %v261 = vpack.c.b16 %v251, %v249
      %v262 = vpack.c.b16 %v252, %v250
      %v263 = vpack.c.b16 %v255, %v253
      %v264 = vpack.c.b16 %v256, %v254
      %v294 = vunpack.c.l.b16 %v208
      %v295 = vunpack.c.l.b16 %v209
      %v296 = vunpack.c.l.b16 %v210
      %v297 = vunpack.c.l.b16 %v211
      %v298 = vunpack.c.l.b16 %v212
      %v299 = vunpack.c.l.b16 %v213
      %v300 = vunpack.c.l.b16 %v214
      %v301 = vunpack.c.l.b16 %v215
      %v302 = vunpack.c.l.b16 %v216
      %v303 = vunpack.c.l.b16 %v217
      %v304 = vunpack.c.l.b16 %v218
      %v305 = vunpack.c.l.b16 %v219
      %v306 = vunpack.c.l.b16 %v220
      %v307 = vunpack.c.l.b16 %v221
      %v308 = vunpack.c.l.b16 %v222
      %v309 = vunpack.c.l.b16 %v223
      %v310 = vunpack.c.l.b16 %v224
      %v311 = vunpack.c.l.b16 %v225
      %v312 = vunpack.c.l.b16 %v226
      %v313 = vunpack.c.l.b16 %v227
      %v314 = vunpack.c.l.b16 %v228
      %v315 = vunpack.c.l.b16 %v229
      %v316 = vunpack.c.l.b16 %v230
      %v317 = vunpack.c.l.b16 %v231
      %v318 = vunpack.c.l.b16 %v232
      %v319 = vpack.c.b16 %v295, %v294
      %v320 = vpack.c.b16 %v297, %v296
      %v321 = vpack.c.b16 %v299, %v298
      %v322 = vpack.c.b16 %v301, %v300
      %v323 = vpack.c.b16 %v303, %v302
      %v324 = vpack.c.b16 %v305, %v304
      %v325 = vpack.c.b16 %v307, %v306
      %v326 = vpack.c.b16 %v309, %v308
      %v327 = vpack.c.b16 %v311, %v310
      %v328 = vpack.c.b16 %v313, %v312
      %v329 = vpack.c.b16 %v315, %v314
      %v330 = vpack.c.b16 %v317, %v316
      %v331 = vpack.c.b16 %v318, %v318
      %vm344 = vcmask 588800
      %v346 = vsel %vm344, %v258, 0
      %v349 = vsel %vm344, %v260, 0
      %v352 = vsel %vm344, %v262, 0
      %v355 = vsel %vm344, %v264, 0
      %vm357 = vcmask 1043456
      %v359 = vsel %vm357, %v331, 0
      %361 = vmatpush.bf16.msra.mxu0 %v326
      %362 = vmatpush.bf16.msra.mxu0 %v325
      %363 = vmatpush.bf16.msra.mxu0 %v324
      %364 = vmatpush.bf16.msra.mxu0 %v323
      %365 = vmatpush.bf16.msra.mxu0 %v322
      %366 = vmatpush.bf16.msra.mxu0 %v321
      %367 = vmatpush.bf16.msra.mxu0 %v320
      %368 = vmatpush.bf16.msra.mxu0 %v319
      %369 = vmatmul.bf16.gmra.mxu0 %v257
      %v370 = vpop.f32.mrf.mxu0
      %v371 = vadd.f32 0.0, %v370
      %v372 = vpop.f32.mrf.mxu0
      %v373 = vadd.f32 0.0, %v372
      %374 = vmatmul.bf16.gmra.mxu0 %v259
      %v375 = vpop.f32.mrf.mxu0
      %v376 = vadd.f32 0.0, %v375
      %v377 = vpop.f32.mrf.mxu0
      %v378 = vadd.f32 0.0, %v377
      %379 = vmatmul.bf16.gmra.mxu0 %v261
      %v380 = vpop.f32.mrf.mxu0
      %v381 = vadd.f32 0.0, %v380
      %v382 = vpop.f32.mrf.mxu0
      %v383 = vadd.f32 0.0, %v382
      %384 = vmatmul.bf16.gmra.mxu0 %v263
      %v385 = vpop.f32.mrf.mxu0
      %v386 = vadd.f32 0.0, %v385
      %v387 = vpop.f32.mrf.mxu0
      %v388 = vadd.f32 0.0, %v387
      %389 = vdwg.mxu0
      %390 = vmatpush.bf16.msra.mxu0 0
      %391 = vmatpush.bf16.msra.mxu0 0
      %392 = vmatpush.bf16.msra.mxu0 0
      %393 = vmatpush.bf16.msra.mxu0 %v359
      %394 = vmatpush.bf16.msra.mxu0 %v330
      %395 = vmatpush.bf16.msra.mxu0 %v329
      %396 = vmatpush.bf16.msra.mxu0 %v328
      %397 = vmatpush.bf16.msra.mxu0 %v327
      %398 = vmatmul.bf16.gmra.mxu0 %v346
      %v399 = vpop.f32.mrf.mxu0
      %v400 = vadd.f32 %v371, %v399
      %v401 = vpop.f32.mrf.mxu0
      %v402 = vadd.f32 %v373, %v401
      %403 = vmatmul.bf16.gmra.mxu0 %v349
      %v404 = vpop.f32.mrf.mxu0
      %v405 = vadd.f32 %v376, %v404
      %v406 = vpop.f32.mrf.mxu0
      %v407 = vadd.f32 %v378, %v406
      %408 = vmatmul.bf16.gmra.mxu0 %v352
      %v409 = vpop.f32.mrf.mxu0
      %v410 = vadd.f32 %v381, %v409
      %v411 = vpop.f32.mrf.mxu0
      %v412 = vadd.f32 %v383, %v411
      %413 = vmatmul.bf16.gmra.mxu0 %v355
      %v414 = vpop.f32.mrf.mxu0
      %v415 = vadd.f32 %v386, %v414
      %v416 = vpop.f32.mrf.mxu0
      %v417 = vadd.f32 %v388, %v416
      %418 = vdwg.mxu0
      %vm419 = vcmask 64512
      %420 = vst.msk [vmem:[%s197] sm:$0xff] %vm419, %v400
      %421 = vst.msk [vmem:[%s197 + $0x8] sm:$0xff] %vm419, %v402
      %422 = vst.msk [vmem:[%s197 + $0x10] sm:$0xff] %vm419, %v405
      %423 = vst.msk [vmem:[%s197 + $0x18] sm:$0xff] %vm419, %v407
      %424 = vst.msk [vmem:[%s197 + $0x20] sm:$0xff] %vm419, %v410
      %425 = vst.msk [vmem:[%s197 + $0x28] sm:$0xff] %vm419, %v412
      %426 = vst.msk [vmem:[%s197 + $0x30] sm:$0xff] %vm419, %v415
      %427 = vst.msk [vmem:[%s197 + $0x38] sm:$0xff] %vm419, %v417
      %p428 = scmp.eq.s32.totalorder %s16, 0
      // Predicated region
      $region29: #{down_transition_forward.8} parent=27 // pred_check
        %p429 = pneg %p428
      $region30: #{down_transition_forward.8} parent=27 // pred_check_branch
        %431 = sbr.rel (%p429) target = $region32
      $region31: #{down_transition_forward.8} parent=27 // pred_region
        %vm432 = vcmask 57344
        %433 = vst.msk [vmem:[%s3] sm:$0x1] %vm432, 0.0
        %434 = vst.msk [vmem:[%s4] sm:$0x1] %vm432, 0.0
      $region32: #{down_transition_forward.8} parent=27 // pred_fallthru
        _
      %v435 = vld [vmem:[%s3] sm:$0x1]
      %v436 = vsel %vm419, %v400, 0.0
      %v437 = vsel %vm419, %v402, 0.0
      %v438 = vadd.f32 %v436, %v437
      %v439 = vsel %vm419, %v405, 0.0
      %v440 = vadd.f32 %v438, %v439
      %v441 = vsel %vm419, %v407, 0.0
      %v442 = vadd.f32 %v440, %v441
      %v443 = vsel %vm419, %v410, 0.0
      %v444 = vadd.f32 %v442, %v443
      %v445 = vsel %vm419, %v412, 0.0
      %v446 = vadd.f32 %v444, %v445
      %v447 = vsel %vm419, %v415, 0.0
      %v448 = vadd.f32 %v446, %v447
      %v449 = vsel %vm419, %v417, 0.0
      %v450 = vadd.f32 %v448, %v449
      %v451 = vrot.slane %v450, 4
      %v452 = vadd.f32 %v450, %v451
      %v453 = vrot.slane %v452, 2
      %v454 = vadd.f32 %v452, %v453
      %v455 = vrot.slane %v454, 1
      %v456 = vadd.f32 %v454, %v455
      %v457 = vadd.f32 %v435, %v456
      %vm458 = vcmask 57344
      %459 = vst.msk [vmem:[%s3] sm:$0x1] %vm458, %v457
      %v460 = vld [vmem:[%s4] sm:$0x1]
      %v461 = vmul.f32 %v400, %v400
      %v462 = vmul.f32 %v402, %v402
      %v463 = vmul.f32 %v405, %v405
      %v464 = vmul.f32 %v407, %v407
      %v465 = vmul.f32 %v410, %v410
      %v466 = vmul.f32 %v412, %v412
      %v467 = vmul.f32 %v415, %v415
      %v468 = vmul.f32 %v417, %v417
      %v469 = vsel %vm419, %v461, 0.0
      %v470 = vsel %vm419, %v462, 0.0
      %v471 = vadd.f32 %v469, %v470
      %v472 = vsel %vm419, %v463, 0.0
      %v473 = vadd.f32 %v471, %v472
      %v474 = vsel %vm419, %v464, 0.0
      %v475 = vadd.f32 %v473, %v474
      %v476 = vsel %vm419, %v465, 0.0
      %v477 = vadd.f32 %v475, %v476
      %v478 = vsel %vm419, %v466, 0.0
      %v479 = vadd.f32 %v477, %v478
      %v480 = vsel %vm419, %v467, 0.0
      %v481 = vadd.f32 %v479, %v480
      %v482 = vsel %vm419, %v468, 0.0
      %v483 = vadd.f32 %v481, %v482
      %v484 = vrot.slane %v483, 4
      %v485 = vadd.f32 %v483, %v484
      %v486 = vrot.slane %v485, 2
      %v487 = vadd.f32 %v485, %v486
      %v488 = vrot.slane %v487, 1
      %v489 = vadd.f32 %v487, %v488
      %v490 = vadd.f32 %v460, %v489
      %491 = vst.msk [vmem:[%s4] sm:$0x1] %vm458, %v490
      %s492 = smul.u32 8, %s16
      %p493 = scmp.lt.s32.totalorder %s492, 15
      %s494 = scalar_select %p493, %s492, 15
      %s495 = smul.addr %s494, 8
      %s496 = scalar_lea.vmem %s2, %s495
      // Predicated region
      $region33: #{down_transition_forward.8} parent=27 // pred_check
        %p497 = pneg %p81
      $region34: #{down_transition_forward.8} parent=27 // pred_check_branch
        %499 = sbr.rel (%p497) target = $region36
      $region35: #{down_transition_forward.8} parent=27 // pred_region
        %s500 = smul.u32 8, %s16
      $region36: #{down_transition_forward.8} parent=27 // pred_fallthru
        _
      // Predicated region
      $region37: #{down_transition_forward.8} parent=27 // pred_check
        %p501 = pneg %p102
      $region38: #{down_transition_forward.8} parent=27 // pred_check_branch
        %503 = sbr.rel (%p501) target = $region40
      $region39: #{down_transition_forward.8} parent=27 // pred_region
        _
      $region40: #{down_transition_forward.8} parent=27 // pred_fallthru
        _
      // Predicated region
      $region41: #{down_transition_forward.8} parent=27 // pred_check
        %p504 = pneg %p123
      $region42: #{down_transition_forward.8} parent=27 // pred_check_branch
        %506 = sbr.rel (%p504) target = $region44
      $region43: #{down_transition_forward.8} parent=27 // pred_region
        _
      $region44: #{down_transition_forward.8} parent=27 // pred_fallthru
        _
      // Predicated region
      $region45: #{down_transition_forward.8} parent=27 // pred_check
        %p507 = pneg %p102
      $region46: #{down_transition_forward.8} parent=27 // pred_check_branch
        %509 = sbr.rel (%p507) target = $region48
      $region47: #{down_transition_forward.8} parent=27 // pred_region
        _
      $region48: #{down_transition_forward.8} parent=27 // pred_fallthru
        _
      // Predicated region
      $region49: #{down_transition_forward.8} parent=27 // pred_check
        %p510 = pneg %p123
      $region50: #{down_transition_forward.8} parent=27 // pred_check_branch
        %512 = sbr.rel (%p510) target = $region52
      $region51: #{down_transition_forward.8} parent=27 // pred_region
        _
      $region52: #{down_transition_forward.8} parent=27 // pred_fallthru
        _
    $region28: #{down_transition_forward.8} parent=5 // pred_fallthru
      _
    %p513 = scmp.le.s32.totalorder 2, %s11
    // Predicated region
    $region53: #{down_transition_forward.8} parent=5 // pred_check
      %p514 = pneg %p513
    $region54: #{down_transition_forward.8} parent=5 // pred_check_branch
      %516 = sbr.rel (%p514) target = $region56
    $region55: #{down_transition_forward.8} parent=5 // pred_region
      %s517 = ssub.s32 %s11, 2
      // Predicated region
      $region57: #{down_transition_forward.8} parent=55 // pred_check
        %p518 = pneg %p87
      $region58: #{down_transition_forward.8} parent=55 // pred_check_branch
        %520 = sbr.rel (%p518) target = $region60
      $region59: #{down_transition_forward.8} parent=55 // pred_region
        %s521 = smul.u32 8, %s17
        %p522 = scmp.lt.s32.totalorder %s521, 15
        %s523 = scalar_select %p522, %s521, 15
        %s524 = smul.addr %s523, 8
        %s525 = scalar_lea.vmem %s2, %s524
      $region60: #{down_transition_forward.8} parent=55 // pred_fallthru
        _
    $region56: #{down_transition_forward.8} parent=5 // pred_fallthru
      _
  $region6: #{down_transition_forward.8} parent=0 // loop_footer
    %s15 = sadd.s32 1, %s11
  $region7: #{down_transition_forward.8} parent=0 // loop_footer_branch
    %10 = sbr.rel target = $region3
  $region8: #{down_transition_forward.8} parent=0 // loop_exit
    _

// kernel: down_transition_forward.11
$region0: #{down_transition_forward.11}
  #allocation0 [shape = 'u32[]', space=smem, size = 0x4, offset = 0x4, fixed_abs, tag = 'smem constant byte address 0x4 - core index']
  #allocation1 [shape = 'u32[72,128]{1,0:T(1,128)}', space=vmem, size = 0x9000, scoped, tag = 'internal scratch']
  %s0 = inlined_call_operand.vmem [shape: f32[128,8], index: 0, kind: input, shape index: {}]
  %s1 = inlined_call_operand.vmem [shape: f32[1,8], index: 1, kind: input, shape index: {}]
  %s2 = inlined_call_operand.vmem [shape: f32[1,8], index: 2, kind: input, shape index: {}]
  %s3 = inlined_call_operand.vmem [shape: f32[1,8], index: 3, kind: input, shape index: {}]
  %s4 = inlined_call_operand.vmem [shape: f32[1,8], index: 4, kind: input, shape index: {}]
  %s5 = inlined_call_operand.vmem [shape: f32[128,8], index: 5, kind: input, shape index: {}]
  %s6 = inlined_call_operand.vmem [shape: f32[128,8], index: 6, kind: output, shape index: {}]
  %s7 = sld [smem:[#allocation0]]
  $region57: #{down_transition_forward.11} parent=0
    _
  %s9 = ssub.s32 1, %s7
  %s10 = scalar_select 0, %s9, %s7
  loop: start=0, step=1, limit=4
  $region2: #{down_transition_forward.11} parent=0 // loop_pre_header
    _
  $region3: #{down_transition_forward.11} parent=0 // loop_header
    %s12 = sphi 0, %s16
    %p13 = scmp.ge.s32.totalorder %s12, 4
    %s22 = sphi 0, %s24
    %s25 = sphi 0, %s22
    %s26 = sphi 0, %s25
    %s42 = sphi 0, %s26
    %s46 = sphi 0, %s46
    %s48 = sphi 0, %s46
    %s49 = sphi 0, %s48
    %s63 = sphi 0, %s49
    %s67 = sphi 0, %s67
    %s69 = sphi 0, %s67
    %s70 = sphi 0, %s69
    %s84 = sphi 0, %s70
    %s88 = sphi 0, %s88
    %s90 = sphi 0, %s88
    %s91 = sphi 0, %s90
    %s105 = sphi 0, %s91
    %s109 = sphi 0, %s109
    %s111 = sphi 0, %s109
    %s112 = sphi 0, %s111
    %s126 = sphi 0, %s112
    %s132 = sphi 0, %s134
    %s135 = sphi 0, %s132
    %s136 = sphi 0, %s135
    %s152 = sphi 0, %s136
    %s158 = sphi 0, %s160
    %s161 = sphi 0, %s158
    %s162 = sphi 0, %s161
    %s178 = sphi 0, %s162
  $region4: #{down_transition_forward.11} parent=0 // loop_header_branch
    %15 = sbr.rel (%p13) target = $region8
  $region5: #{down_transition_forward.11} parent=0 // loop_body
    %s17 = ssub.s32 %s12, 1
    %s18 = ssub.s32 %s12, 2
    %s19 = sadd.s32 %s12, 1
    %s20 = ssub.s32 %s12, %s19
    %p21 = scmp.eq.s32.totalorder %s20, 0
    %s23 = sadd.s32 %s22, 1
    %s24 = scalar_select %p21, %s22, %s23
    %p27 = pneg %p21
    %p28 = scmp.eq.s32.totalorder %s12, 1
    %p29 = por %p27, %p28
    %p30 = scmp.ne.s32.totalorder %s22, %s25
    %p31 = scmp.eq.s32.totalorder %s12, 0
    %p32 = por %p30, %p31
    %p33 = scmp.ne.s32.totalorder %s22, %s25
    %p34 = scmp.eq.s32.totalorder %s17, 1
    %p35 = por %p33, %p34
    %p36 = scmp.ne.s32.totalorder %s25, %s26
    %p37 = scmp.eq.s32.totalorder %s17, 0
    %p38 = por %p36, %p37
    %p39 = scmp.ne.s32.totalorder %s25, %s26
    %p40 = scmp.eq.s32.totalorder %s18, 1
    %p41 = por %p39, %p40
    %p43 = scmp.ne.s32.totalorder %s26, %s42
    %p44 = scmp.eq.s32.totalorder %s18, 0
    %p45 = por %p43, %p44
    %s47 = sadd.s32 %s46, 1
    %p50 = scmp.eq.s32.totalorder %s12, 1
    %p51 = scmp.ne.s32.totalorder %s46, %s48
    %p52 = scmp.eq.s32.totalorder %s12, 0
    %p53 = por %p51, %p52
    %p54 = scmp.ne.s32.totalorder %s46, %s48
    %p55 = scmp.eq.s32.totalorder %s17, 1
    %p56 = por %p54, %p55
    %p57 = scmp.ne.s32.totalorder %s48, %s49
    %p58 = scmp.eq.s32.totalorder %s17, 0
    %p59 = por %p57, %p58
    %p60 = scmp.ne.s32.totalorder %s48, %s49
    %p61 = scmp.eq.s32.totalorder %s18, 1
    %p62 = por %p60, %p61
    %p64 = scmp.ne.s32.totalorder %s49, %s63
    %p65 = scmp.eq.s32.totalorder %s18, 0
    %p66 = por %p64, %p65
    %s68 = sadd.s32 %s67, 1
    %p71 = scmp.eq.s32.totalorder %s12, 1
    %p72 = scmp.ne.s32.totalorder %s67, %s69
    %p73 = scmp.eq.s32.totalorder %s12, 0
    %p74 = por %p72, %p73
    %p75 = scmp.ne.s32.totalorder %s67, %s69
    %p76 = scmp.eq.s32.totalorder %s17, 1
    %p77 = por %p75, %p76
    %p78 = scmp.ne.s32.totalorder %s69, %s70
    %p79 = scmp.eq.s32.totalorder %s17, 0
    %p80 = por %p78, %p79
    %p81 = scmp.ne.s32.totalorder %s69, %s70
    %p82 = scmp.eq.s32.totalorder %s18, 1
    %p83 = por %p81, %p82
    %p85 = scmp.ne.s32.totalorder %s70, %s84
    %p86 = scmp.eq.s32.totalorder %s18, 0
    %p87 = por %p85, %p86
    %s89 = sadd.s32 %s88, 1
    %p92 = scmp.eq.s32.totalorder %s12, 1
    %p93 = scmp.ne.s32.totalorder %s88, %s90
    %p94 = scmp.eq.s32.totalorder %s12, 0
    %p95 = por %p93, %p94
    %p96 = scmp.ne.s32.totalorder %s88, %s90
    %p97 = scmp.eq.s32.totalorder %s17, 1
    %p98 = por %p96, %p97
    %p99 = scmp.ne.s32.totalorder %s90, %s91
    %p100 = scmp.eq.s32.totalorder %s17, 0
    %p101 = por %p99, %p100
    %p102 = scmp.ne.s32.totalorder %s90, %s91
    %p103 = scmp.eq.s32.totalorder %s18, 1
    %p104 = por %p102, %p103
    %p106 = scmp.ne.s32.totalorder %s91, %s105
    %p107 = scmp.eq.s32.totalorder %s18, 0
    %p108 = por %p106, %p107
    %s110 = sadd.s32 %s109, 1
    %p113 = scmp.eq.s32.totalorder %s12, 1
    %p114 = scmp.ne.s32.totalorder %s109, %s111
    %p115 = scmp.eq.s32.totalorder %s12, 0
    %p116 = por %p114, %p115
    %p117 = scmp.ne.s32.totalorder %s109, %s111
    %p118 = scmp.eq.s32.totalorder %s17, 1
    %p119 = por %p117, %p118
    %p120 = scmp.ne.s32.totalorder %s111, %s112
    %p121 = scmp.eq.s32.totalorder %s17, 0
    %p122 = por %p120, %p121
    %p123 = scmp.ne.s32.totalorder %s111, %s112
    %p124 = scmp.eq.s32.totalorder %s18, 1
    %p125 = por %p123, %p124
    %p127 = scmp.ne.s32.totalorder %s112, %s126
    %p128 = scmp.eq.s32.totalorder %s18, 0
    %p129 = por %p127, %p128
    %s130 = ssub.s32 %s12, %s19
    %p131 = scmp.eq.s32.totalorder %s130, 0
    %s133 = sadd.s32 %s132, 1
    %s134 = scalar_select %p131, %s132, %s133
    %p137 = pneg %p131
    %p138 = scmp.eq.s32.totalorder %s12, 1
    %p139 = por %p137, %p138
    %p140 = scmp.ne.s32.totalorder %s132, %s135
    %p141 = scmp.eq.s32.totalorder %s12, 0
    %p142 = por %p140, %p141
    %p143 = scmp.ne.s32.totalorder %s132, %s135
    %p144 = scmp.eq.s32.totalorder %s17, 1
    %p145 = por %p143, %p144
    %p146 = scmp.ne.s32.totalorder %s135, %s136
    %p147 = scmp.eq.s32.totalorder %s17, 0
    %p148 = por %p146, %p147
    %p149 = scmp.ne.s32.totalorder %s135, %s136
    %p150 = scmp.eq.s32.totalorder %s18, 1
    %p151 = por %p149, %p150
    %p153 = scmp.ne.s32.totalorder %s136, %s152
    %p154 = scmp.eq.s32.totalorder %s18, 0
    %p155 = por %p153, %p154
    %s156 = ssub.s32 %s12, %s19
    %p157 = scmp.eq.s32.totalorder %s156, 0
    %s159 = sadd.s32 %s158, 1
    %s160 = scalar_select %p157, %s158, %s159
    %p163 = pneg %p157
    %p164 = scmp.eq.s32.totalorder %s12, 1
    %p165 = por %p163, %p164
    %p166 = scmp.ne.s32.totalorder %s158, %s161
    %p167 = scmp.eq.s32.totalorder %s12, 0
    %p168 = por %p166, %p167
    %p169 = scmp.ne.s32.totalorder %s158, %s161
    %p170 = scmp.eq.s32.totalorder %s17, 1
    %p171 = por %p169, %p170
    %p172 = scmp.ne.s32.totalorder %s161, %s162
    %p173 = scmp.eq.s32.totalorder %s17, 0
    %p174 = por %p172, %p173
    %p175 = scmp.ne.s32.totalorder %s161, %s162
    %p176 = scmp.eq.s32.totalorder %s18, 1
    %p177 = por %p175, %p176
    %p179 = scmp.ne.s32.totalorder %s162, %s178
    %p180 = scmp.eq.s32.totalorder %s18, 0
    %p181 = por %p179, %p180
    %p182 = scmp.le.s32.totalorder 1, %s12
    %p183 = scmp.lt.s32.totalorder %s12, 3
    %p184 = pnand %p182, %p183
    %p185 = pneg %p184
    // Predicated region
    $region9: #{down_transition_forward.11} parent=5 // pred_check
      _
    $region10: #{down_transition_forward.11} parent=5 // pred_check_branch
      %187 = sbr.rel (%p184) target = $region12
    $region11: #{down_transition_forward.11} parent=5 // pred_region
      %s188 = ssub.s32 %s12, 1
      // Predicated region
      $region13: #{down_transition_forward.11} parent=11 // pred_check
        %p189 = pneg %p59
      $region14: #{down_transition_forward.11} parent=11 // pred_check_branch
        %191 = sbr.rel (%p189) target = $region16
      $region15: #{down_transition_forward.11} parent=11 // pred_region
        _
      $region16: #{down_transition_forward.11} parent=11 // pred_fallthru
        _
      // Predicated region
      $region17: #{down_transition_forward.11} parent=11 // pred_check
        %p192 = pneg %p80
      $region18: #{down_transition_forward.11} parent=11 // pred_check_branch
        %194 = sbr.rel (%p192) target = $region20
      $region19: #{down_transition_forward.11} parent=11 // pred_region
        _
      $region20: #{down_transition_forward.11} parent=11 // pred_fallthru
        _
      // Predicated region
      $region21: #{down_transition_forward.11} parent=11 // pred_check
        %p195 = pneg %p101
      $region22: #{down_transition_forward.11} parent=11 // pred_check_branch
        %197 = sbr.rel (%p195) target = $region24
      $region23: #{down_transition_forward.11} parent=11 // pred_region
        _
      $region24: #{down_transition_forward.11} parent=11 // pred_fallthru
        _
      // Predicated region
      $region25: #{down_transition_forward.11} parent=11 // pred_check
        %p198 = pneg %p122
      $region26: #{down_transition_forward.11} parent=11 // pred_check_branch
        %200 = sbr.rel (%p198) target = $region28
      $region27: #{down_transition_forward.11} parent=11 // pred_region
        _
      $region28: #{down_transition_forward.11} parent=11 // pred_fallthru
        _
    $region12: #{down_transition_forward.11} parent=5 // pred_fallthru
      _
    %p201 = scmp.lt.s32.totalorder %s12, 2
    // Predicated region
    $region29: #{down_transition_forward.11} parent=5 // pred_check
      %p202 = pneg %p201
    $region30: #{down_transition_forward.11} parent=5 // pred_check_branch
      %204 = sbr.rel (%p202) target = $region32
    $region31: #{down_transition_forward.11} parent=5 // pred_region
      // Predicated region
      $region33: #{down_transition_forward.11} parent=31 // pred_check
        %p205 = pneg %p32
      $region34: #{down_transition_forward.11} parent=31 // pred_check_branch
        %207 = sbr.rel (%p205) target = $region36
      $region35: #{down_transition_forward.11} parent=31 // pred_region
        %s208 = smul.u32 8, %s12
        %p209 = scmp.lt.s32.totalorder %s208, 15
        %s210 = scalar_select %p209, %s208, 15
        %s211 = smul.addr %s210, 8
        %s212 = scalar_lea.vmem %s0, %s211
        %s213 = smul.u32 8, %s12
      $region36: #{down_transition_forward.11} parent=31 // pred_fallthru
        _
      // Predicated region
      $region37: #{down_transition_forward.11} parent=31 // pred_check
        %p214 = pneg %p142
      $region38: #{down_transition_forward.11} parent=31 // pred_check_branch
        %216 = sbr.rel (%p214) target = $region40
      $region39: #{down_transition_forward.11} parent=31 // pred_region
        %s217 = smul.u32 8, %s12
        %p218 = scmp.lt.s32.totalorder %s217, 15
        %s219 = scalar_select %p218, %s217, 15
        %s220 = smul.addr %s219, 8
        %s221 = scalar_lea.vmem %s5, %s220
        %s222 = smul.u32 8, %s12
      $region40: #{down_transition_forward.11} parent=31 // pred_fallthru
        _
    $region32: #{down_transition_forward.11} parent=5 // pred_fallthru
      _
    %p223 = scmp.le.s32.totalorder 1, %s12
    %p224 = scmp.lt.s32.totalorder %s12, 3
    %p225 = pnand %p223, %p224
    %p226 = pneg %p225
    // Predicated region
    $region41: #{down_transition_forward.11} parent=5 // pred_check
      _
    $region42: #{down_transition_forward.11} parent=5 // pred_check_branch
      %228 = sbr.rel (%p225) target = $region44
    $region43: #{down_transition_forward.11} parent=5 // pred_region
      %s229 = ssub.s32 %s12, 1
      %s230 = smul.u32 8, %s17
      %p231 = scmp.lt.s32.totalorder %s230, 15
      %s232 = scalar_select %p231, %s230, 15
      %s233 = smul.addr %s232, 8
      %s234 = scalar_lea.vmem %s0, %s233
      %p235 = pneg %p38
      %p236 = pneg %p35
      %p237 = pneg %p59
      %p238 = pneg %p56
      %p239 = pneg %p80
      %p240 = pneg %p77
      %p241 = pneg %p101
      %p242 = pneg %p98
      %p243 = pneg %p122
      %p244 = pneg %p119
      %s245 = smul.u32 8, %s17
      %p246 = scmp.lt.s32.totalorder %s245, 15
      %s247 = scalar_select %p246, %s245, 15
      %s248 = smul.addr %s247, 8
      %s249 = scalar_lea.vmem %s5, %s248
      %p250 = pneg %p148
      %p251 = pneg %p145
      %p252 = pneg %p174
      %p253 = pneg %p171
      %s254 = smul.u32 8, %s17
      %p255 = scmp.lt.s32.totalorder %s254, 15
      %s256 = scalar_select %p255, %s254, 15
      %s257 = smul.addr %s256, 8
      %s258 = scalar_lea.vmem %s6, %s257
      %s259 = smul.u32 8, %s17
      %p260 = scmp.lt.s32.totalorder %s259, 15
      %s261 = scalar_select %p260, %s259, 15
      %s262 = smul.addr %s261, 8
      %s263 = scalar_lea.vmem %s0, %s262
      %s264 = smul.u32 8, %s17
      %s265 = smul.u32 8, %s17
      %p266 = scmp.lt.s32.totalorder %s265, 15
      %s267 = scalar_select %p266, %s265, 15
      %s268 = smul.addr %s267, 8
      %s269 = scalar_lea.vmem %s5, %s268
      %s270 = smul.u32 8, %s17
      %s271 = smul.u32 8, %s17
      %p272 = scmp.lt.s32.totalorder %s271, 15
      %s273 = scalar_select %p272, %s271, 15
      %s274 = smul.addr %s273, 8
      %s275 = scalar_lea.vmem %s6, %s274
      %s276 = smul.u32 8, %s17
      %v277 = vld [vmem:[%s1] sm:$0x1]
      %v278 = vmul.f32 %v277, 0.0078125
      %v279 = vld [vmem:[%s2] sm:$0x1]
      %v280 = vmul.f32 %v279, 0.0078125
      %v281 = vmul.f32 %v278, %v278
      %v282 = vsub.f32 %v280, %v281
      %v283 = vld [vmem:[%s3] sm:$0x1]
      %v284 = vadd.f32 %v282, 1e-05
      %v285 = vrsqrt.pop %v284
      %v286 = vmul.f32 %v285, %v284
      %v287 = vmul.f32 %v286, %v285
      %v288 = vmul.f32 0.5, %v287
      %v289 = vsub.f32 1.5, %v288
      %v290 = vmul.f32 %v285, %v289
      %vm291 = vweird.f32 %v284
      %vm292 = vweird.f32 %v285
      %vm293 = vmor %vm291, %vm292
      %v294 = vsel %vm293, %v285, %v290
      %v295 = vmul.f32 %v283, %v294
      %v296 = vld [vmem:[%s4] sm:$0x1]
      %v297 = vmul.f32 %v278, %v295
      %v298 = vsub.f32 %v296, %v297
      %v299 = vld [vmem:[%s263] sm:$0xff]
      %v300 = vld [vmem:[%s263 + $0x8] sm:$0xff]
      %v301 = vld [vmem:[%s263 + $0x10] sm:$0xff]
      %v302 = vld [vmem:[%s263 + $0x18] sm:$0xff]
      %v303 = vld [vmem:[%s263 + $0x20] sm:$0xff]
      %v304 = vld [vmem:[%s263 + $0x28] sm:$0xff]
      %v305 = vld [vmem:[%s263 + $0x30] sm:$0xff]
      %v306 = vld [vmem:[%s263 + $0x38] sm:$0xff]
      %v308 = vperm.slane %v295, 0
      %v310 = vmul.f32 %v299, %v308
      %v311 = vmul.f32 %v300, %v308
      %v312 = vmul.f32 %v301, %v308
      %v313 = vmul.f32 %v302, %v308
      %v314 = vmul.f32 %v303, %v308
      %v315 = vmul.f32 %v304, %v308
      %v316 = vmul.f32 %v305, %v308
      %v317 = vmul.f32 %v306, %v308
      %v319 = vperm.slane %v298, 0
      %v321 = vadd.f32 %v310, %v319
      %v322 = vadd.f32 %v311, %v319
      %v323 = vadd.f32 %v312, %v319
      %v324 = vadd.f32 %v313, %v319
      %v325 = vadd.f32 %v314, %v319
      %v326 = vadd.f32 %v315, %v319
      %v327 = vadd.f32 %v316, %v319
      %v328 = vadd.f32 %v317, %v319
      %vm329 = vcmp.gt.f32.partialorder %v321, 0.0
      %vm330 = vcmp.gt.f32.partialorder %v322, 0.0
      %vm331 = vcmp.gt.f32.partialorder %v323, 0.0
      %vm332 = vcmp.gt.f32.partialorder %v324, 0.0
      %vm333 = vcmp.gt.f32.partialorder %v325, 0.0
      %vm334 = vcmp.gt.f32.partialorder %v326, 0.0
      %vm335 = vcmp.gt.f32.partialorder %v327, 0.0
      %vm336 = vcmp.gt.f32.partialorder %v328, 0.0
      %v337 = vmin.f32 %v321, 0.0
      %v338 = vmin.f32 %v322, 0.0
      %v339 = vmin.f32 %v323, 0.0
      %v340 = vmin.f32 %v324, 0.0
      %v341 = vmin.f32 %v325, 0.0
      %v342 = vmin.f32 %v326, 0.0
      %v343 = vmin.f32 %v327, 0.0
      %v344 = vmin.f32 %v328, 0.0
      %v345 = vmul.f32 %v337, 1.442695
      %v346 = vpow.pop %v345
      %v347 = vmul.f32 %v338, 1.442695
      %v348 = vpow.pop %v347
      %v349 = vmul.f32 %v339, 1.442695
      %v350 = vpow.pop %v349
      %v351 = vmul.f32 %v340, 1.442695
      %v352 = vpow.pop %v351
      %v353 = vmul.f32 %v341, 1.442695
      %v354 = vpow.pop %v353
      %v355 = vmul.f32 %v342, 1.442695
      %v356 = vpow.pop %v355
      %v357 = vmul.f32 %v343, 1.442695
      %v358 = vpow.pop %v357
      %v359 = vmul.f32 %v344, 1.442695
      %v360 = vpow.pop %v359
      %v361 = vsub.f32 %v346, 1.0
      %v362 = vsub.f32 %v348, 1.0
      %v363 = vsub.f32 %v350, 1.0
      %v364 = vsub.f32 %v352, 1.0
      %v365 = vsub.f32 %v354, 1.0
      %v366 = vsub.f32 %v356, 1.0
      %v367 = vsub.f32 %v358, 1.0
      %v368 = vsub.f32 %v360, 1.0
      %v369 = vsel %vm329, %v321, %v361
      %v370 = vsel %vm330, %v322, %v362
      %v371 = vsel %vm331, %v323, %v363
      %v372 = vsel %vm332, %v324, %v364
      %v373 = vsel %vm333, %v325, %v365
      %v374 = vsel %vm334, %v326, %v366
      %v375 = vsel %vm335, %v327, %v367
      %v376 = vsel %vm336, %v328, %v368
      %v377 = vld [vmem:[%s269] sm:$0xff]
      %v378 = vld [vmem:[%s269 + $0x8] sm:$0xff]
      %v379 = vld [vmem:[%s269 + $0x10] sm:$0xff]
      %v380 = vld [vmem:[%s269 + $0x18] sm:$0xff]
      %v381 = vld [vmem:[%s269 + $0x20] sm:$0xff]
      %v382 = vld [vmem:[%s269 + $0x28] sm:$0xff]
      %v383 = vld [vmem:[%s269 + $0x30] sm:$0xff]
      %v384 = vld [vmem:[%s269 + $0x38] sm:$0xff]
      %v385 = vadd.f32 %v369, %v377
      %v386 = vadd.f32 %v370, %v378
      %v387 = vadd.f32 %v371, %v379
      %v388 = vadd.f32 %v372, %v380
      %v389 = vadd.f32 %v373, %v381
      %v390 = vadd.f32 %v374, %v382
      %v391 = vadd.f32 %v375, %v383
      %v392 = vadd.f32 %v376, %v384
      %vm393 = vcmp.gt.f32.partialorder %v385, 0.0
      %vm394 = vcmp.gt.f32.partialorder %v386, 0.0
      %vm395 = vcmp.gt.f32.partialorder %v387, 0.0
      %vm396 = vcmp.gt.f32.partialorder %v388, 0.0
      %vm397 = vcmp.gt.f32.partialorder %v389, 0.0
      %vm398 = vcmp.gt.f32.partialorder %v390, 0.0
      %vm399 = vcmp.gt.f32.partialorder %v391, 0.0
      %vm400 = vcmp.gt.f32.partialorder %v392, 0.0
      %v401 = vmin.f32 %v385, 0.0
      %v402 = vmin.f32 %v386, 0.0
      %v403 = vmin.f32 %v387, 0.0
      %v404 = vmin.f32 %v388, 0.0
      %v405 = vmin.f32 %v389, 0.0
      %v406 = vmin.f32 %v390, 0.0
      %v407 = vmin.f32 %v391, 0.0
      %v408 = vmin.f32 %v392, 0.0
      %v409 = vmul.f32 %v401, 1.442695
      %v410 = vpow.pop %v409
      %v411 = vmul.f32 %v402, 1.442695
      %v412 = vpow.pop %v411
      %v413 = vmul.f32 %v403, 1.442695
      %v414 = vpow.pop %v413
      %v415 = vmul.f32 %v404, 1.442695
      %v416 = vpow.pop %v415
      %v417 = vmul.f32 %v405, 1.442695
      %v418 = vpow.pop %v417
      %v419 = vmul.f32 %v406, 1.442695
      %v420 = vpow.pop %v419
      %v421 = vmul.f32 %v407, 1.442695
      %v422 = vpow.pop %v421
      %v423 = vmul.f32 %v408, 1.442695
      %v424 = vpow.pop %v423
      %v425 = vsub.f32 %v410, 1.0
      %v426 = vsub.f32 %v412, 1.0
      %v427 = vsub.f32 %v414, 1.0
      %v428 = vsub.f32 %v416, 1.0
      %v429 = vsub.f32 %v418, 1.0
      %v430 = vsub.f32 %v420, 1.0
      %v431 = vsub.f32 %v422, 1.0
      %v432 = vsub.f32 %v424, 1.0
      %v433 = vsel %vm393, %v385, %v425
      %v434 = vsel %vm394, %v386, %v426
      %v435 = vsel %vm395, %v387, %v427
      %v436 = vsel %vm396, %v388, %v428
      %v437 = vsel %vm397, %v389, %v429
      %v438 = vsel %vm398, %v390, %v430
      %v439 = vsel %vm399, %v391, %v431
      %v440 = vsel %vm400, %v392, %v432
      %vm441 = vcmask 64512
      %442 = vst.msk [vmem:[%s275] sm:$0xff] %vm441, %v433
      %443 = vst.msk [vmem:[%s275 + $0x8] sm:$0xff] %vm441, %v434
      %444 = vst.msk [vmem:[%s275 + $0x10] sm:$0xff] %vm441, %v435
      %445 = vst.msk [vmem:[%s275 + $0x18] sm:$0xff] %vm441, %v436
      %446 = vst.msk [vmem:[%s275 + $0x20] sm:$0xff] %vm441, %v437
      %447 = vst.msk [vmem:[%s275 + $0x28] sm:$0xff] %vm441, %v438
      %448 = vst.msk [vmem:[%s275 + $0x30] sm:$0xff] %vm441, %v439
      %449 = vst.msk [vmem:[%s275 + $0x38] sm:$0xff] %vm441, %v440
      %s450 = smul.u32 8, %s17
      %p451 = scmp.lt.s32.totalorder %s450, 15
      %s452 = scalar_select %p451, %s450, 15
      %s453 = smul.addr %s452, 8
      %s454 = scalar_lea.vmem %s6, %s453
      // Predicated region
      $region45: #{down_transition_forward.11} parent=43 // pred_check
        %p455 = pneg %p171
      $region46: #{down_transition_forward.11} parent=43 // pred_check_branch
        %457 = sbr.rel (%p455) target = $region48
      $region47: #{down_transition_forward.11} parent=43 // pred_region
        %s458 = smul.u32 8, %s17
      $region48: #{down_transition_forward.11} parent=43 // pred_fallthru
        _
    $region44: #{down_transition_forward.11} parent=5 // pred_fallthru
      _
    %p459 = scmp.le.s32.totalorder 2, %s12
    // Predicated region
    $region49: #{down_transition_forward.11} parent=5 // pred_check
      %p460 = pneg %p459
    $region50: #{down_transition_forward.11} parent=5 // pred_check_branch
      %462 = sbr.rel (%p460) target = $region52
    $region51: #{down_transition_forward.11} parent=5 // pred_region
      %s463 = ssub.s32 %s12, 2
      // Predicated region
      $region53: #{down_transition_forward.11} parent=51 // pred_check
        %p464 = pneg %p177
      $region54: #{down_transition_forward.11} parent=51 // pred_check_branch
        %466 = sbr.rel (%p464) target = $region56
      $region55: #{down_transition_forward.11} parent=51 // pred_region
        %s467 = smul.u32 8, %s18
        %p468 = scmp.lt.s32.totalorder %s467, 15
        %s469 = scalar_select %p468, %s467, 15
        %s470 = smul.addr %s469, 8
        %s471 = scalar_lea.vmem %s6, %s470
      $region56: #{down_transition_forward.11} parent=51 // pred_fallthru
        _
    $region52: #{down_transition_forward.11} parent=5 // pred_fallthru
      _
  $region6: #{down_transition_forward.11} parent=0 // loop_footer
    %s16 = sadd.s32 1, %s12
  $region7: #{down_transition_forward.11} parent=0 // loop_footer_branch
    %11 = sbr.rel target = $region3
  $region8: #{down_transition_forward.11} parent=0 // loop_exit
    _

</llo_original>
